<compile_context>
chip_gen: v5e
topology: v5e:2x2
jax: 0.10.0
libtpu: 0.0.40
codegen_flags: <defaults>
</compile_context>

<pallas_src>
import itertools
from functools import partial

import jax
import jax.numpy as jnp
import numpy as np
from jax.experimental import pallas as pl
from jax.experimental.pallas import tpu as pltpu


def _round_up(n, m):
    return ((n + m - 1) // m) * m


def _device_kind():
    try:
        return jax.devices()[0].device_kind.lower()
    except Exception:
        return ""


def _vmem_est(tv, tk, nkp, resident, src_isz, out_isz, cp):
    """Rough VMEM bytes: mask temporaries + double-buffered I/O + scratch."""
    mask_tmp = 6 * tk * tv * 4                 # mz/my/mx/m + cast copies (live)
    gin = 2 * tk * 128 * 4                     # (tk, 3) block padded to 128 lanes
    flow_gout = 2 * 2 * 8 * tv * 4             # (3, tv) blocks padded to 8 sublanes
    outb = 2 * cp * tv * out_isz
    accb = cp * tv * 4
    srcb = 2 * cp * (nkp if resident else tk) * src_isz
    return mask_tmp + gin + flow_gout + outb + accb + srcb


def _st_kernel(klo_ref, kcnt_ref, src_ref, flow_ref, gout_ref, gin_ref,
               out_ref, acc_ref, *, nvt, nk_tiles, src_resident, mxu_dtype,
               mask_bf16):
    """Grid = (batch, output-voxel tile, K step); K step is the reduction axis
    walking only the (data-dependent) window of contributing input tiles.

    klo_ref : (B*NVt,) SMEM   first contributing K tile per output tile
    kcnt_ref: (B*NVt,) SMEM   number of contributing K tiles per output tile
    src_ref : resident: (nk_tiles, Cp, TK) whole padded volume of this batch
              streamed: (1, Cp, TK)        the K tile selected by the index_map
    flow_ref: (1, 3, TV)      displacement (dz, dy, dx) of this output tile
    gout_ref: (3, TV)         identity-grid coords (z, y, x) of output voxels
    gin_ref : (TK, 3)         identity-grid coords (z, y, x) of input rows
    out_ref : (1, Cp, TV)     warped output tile (written on the last K step)
    acc_ref : (Cp, TV) f32    accumulator scratch
    """
    b = pl.program_id(0)
    v = pl.program_id(1)
    s = pl.program_id(2)
    tile_idx = b * nvt + v

    @pl.when(s == 0)
    def _():
        acc_ref[...] = jnp.zeros_like(acc_ref)

    @pl.when(s < kcnt_ref[tile_idx])
    def _():
        flow = flow_ref[0]        # (3, TV)
        gout = gout_ref[...]      # (3, TV)
        # Absolute (un-normalized) sample coordinates; identical to PyTorch's
        # normalize -> grid_sample(align_corners=True) round trip.
        zc = gout[0:1, :] + flow[0:1, :]
        yc = gout[1:2, :] + flow[1:2, :]
        xc = gout[2:3, :] + flow[2:3, :]

        rz = gin_ref[:, 0:1]      # (TK, 1)
        ry = gin_ref[:, 1:2]
        rx = gin_ref[:, 2:3]

        # Separable tent (hat) weights, shape (TK, TV).  Out-of-bounds taps
        # never match any row coordinate -> weight 0 == padding_mode='zeros'.
        mz = jnp.maximum(0.0, 1.0 - jnp.abs(rz - zc))
        my = jnp.maximum(0.0, 1.0 - jnp.abs(ry - yc))
        mx = jnp.maximum(0.0, 1.0 - jnp.abs(rx - xc))
        if mask_bf16:  # bf16 VALU combine (v6e/v7x only); coords stay f32.
            mz = mz.astype(jnp.bfloat16)
            my = my.astype(jnp.bfloat16)
            mx = mx.astype(jnp.bfloat16)
        m = mz * my * mx          # trilinear weights of this (K, V) block

        if src_resident:
            kt = jnp.minimum(klo_ref[tile_idx] + s, nk_tiles - 1)
            src_tile = src_ref[kt]        # (Cp, TK), dynamic first-axis index
        else:
            src_tile = src_ref[0]         # (Cp, TK), DMA'd by the index_map

        if mxu_dtype == jnp.float32:
            acc_ref[...] += jnp.dot(src_tile, m,
                                    preferred_element_type=jnp.float32,
                                    precision=jax.lax.Precision.HIGHEST)
        else:
            acc_ref[...] += jnp.dot(src_tile, m.astype(mxu_dtype),
                                    preferred_element_type=jnp.float32)

    @pl.when(s == pl.num_programs(2) - 1)
    def _():
        out_ref[0] = acc_ref[...].astype(out_ref.dtype)


def spatial_transformer(src, flow, mode="bilinear", *, tile_v=None, tile_k=None,
                        mxu_dtype=jnp.float32, max_disp=None, src_resident=None):
    """Pallas TPU implementation of SpatialTransformer.forward(src, flow, mode).

    mxu_dtype : jnp.float32 (default, exact grid_sample numerics) or
                jnp.bfloat16 (quantizes src + weights, ~1e-2 rel err, cheaper).
    max_disp  : optional STATIC upper bound on |flow_z| (voxels).  When given,
                the reduction grid shrinks to the worst-case window of
                contributing z-slabs (block-sparse skipping); flows whose z
                component exceeds it are silently truncated.  When None the
                full reduction grid is kept, but non-contributing K tiles are
                still skipped at runtime via a per-tile count.
    src_resident : None (auto by VMEM budget) / True / False.
    Note: for a spatial dim of size 1 PyTorch emits NaN/inf; this kernel
    returns finite values instead.
    """
    if mode != "bilinear":
        # TODO(synk): 'nearest' / 'bicubic' grid_sample modes not implemented.
        raise NotImplementedError("only mode='bilinear' is implemented")
    B, C, D, H, W = src.shape
    assert flow.shape == (B, 3, D, H, W)
    Nvox = D * H * W
    HW = H * W

    kind = _device_kind()
    is_v5e = ("v5e" in kind) or ("v5 lite" in kind) or ("v5litepod" in kind)
    is_v7x = "v7" in kind

    # --- tile selection (per generation), clamped to the padded volume size ---
    if tile_k is None:
        tile_k = 256 if is_v7x else 512
    if tile_v is None:
        tile_v = 1024
    assert tile_v % 128 == 0 and tile_k % 128 == 0
    cap_vox = _round_up(Nvox, 128)
    tile_v = min(tile_v, cap_vox)
    tile_k = min(tile_k, cap_vox)
    # v7x has 2 TensorCores: make sure B==1 still yields >=2 parallel V tiles.
    if is_v7x and B == 1 and Nvox > 128:
        tile_v = min(tile_v, max(128, _round_up((Nvox + 1) // 2, 128)))

    Cp = _round_up(C, 8)
    out_isz = jnp.dtype(src.dtype).itemsize
    src_isz = jnp.dtype(mxu_dtype).itemsize
    vmem_cap = (48 << 20) if is_v7x else (100 << 20)

    # Shrink tiles until the VMEM estimate fits the per-generation cap; prefer
    # keeping src resident (one DMA per batch) when it fits the budget.
    while True:
        NKp = _round_up(Nvox, tile_k)
        if src_resident is None:
            resident = _vmem_est(tile_v, tile_k, NKp, True,
                                 src_isz, out_isz, Cp) <= vmem_cap
        else:
            resident = bool(src_resident)
        est = _vmem_est(tile_v, tile_k, NKp, resident, src_isz, out_isz, Cp)
        if est <= vmem_cap or (tile_v <= 256 and tile_k <= 256):
            break
        if tile_v > 256:
            tile_v = max(256, _round_up(tile_v // 2, 128))
        else:
            tile_k = max(256, _round_up(tile_k // 2, 128))
    vmem_limit = int(min(vmem_cap, max(32 << 20, est + (8 << 20))))

    NVp = _round_up(Nvox, tile_v)
    NKp = _round_up(Nvox, tile_k)
    NVt = NVp // tile_v
    nk_tiles = NKp // tile_k

    # --- reduction-grid length: worst-case K-tile window per output tile -----
    if max_disp is None:
        MAXS = nk_tiles
    else:
        slabs = (tile_v - 1) // HW + 2 * int(np.ceil(float(max_disp))) + 3
        rows = min(slabs, D) * HW
        MAXS = min(nk_tiles, (rows + tile_k - 1) // tile_k + 1)
    MAXS = max(1, MAXS)

    # --- identity grid (the registered buffer), precomputed once -------------
    gz = jnp.arange(D, dtype=jnp.float32)
    gy = jnp.arange(H, dtype=jnp.float32)
    gx = jnp.arange(W, dtype=jnp.float32)
    grid_zyx = jnp.stack(jnp.meshgrid(gz, gy, gx, indexing="ij"), axis=0)
    grid_zyx = grid_zyx.reshape(3, Nvox)
    # Output-side coords: edge-pad so padded columns never widen the K window.
    grid_out = jnp.pad(grid_zyx, ((0, 0), (0, NVp - Nvox)), mode="edge")
    # Input-side coords: pad with an impossible coordinate so padded rows never
    # match (src is also zero-padded there -> double safety).
    grid_in = jnp.pad(grid_zyx.T, ((0, NKp - Nvox), (0, 0)),
                      constant_values=-4.0)

    src_f = src.reshape(B, C, Nvox).astype(mxu_dtype)       # pre-cast once
    src_flat = jnp.pad(src_f, ((0, 0), (0, Cp - C), (0, NKp - Nvox)))
    flow_flat = jnp.pad(flow.reshape(B, 3, Nvox).astype(jnp.float32),
                        ((0, 0), (0, 0), (0, NVp - Nvox)))

    # --- per-(batch, V tile) contributing K-tile window [klo, klo+count) -----
    zc_all = grid_out[0][None, :] + flow_flat[:, 0, :]       # (B, NVp)
    zc_t = zc_all.reshape(B, NVt, tile_v)
    zmin = jnp.min(zc_t, axis=-1)
    zmax = jnp.max(zc_t, axis=-1)
    empty = (zmax <= -1.0) | (zmin >= float(D))              # nothing in bounds
    zlo = jnp.clip(jnp.floor(zmin), 0.0, float(D - 1)).astype(jnp.int32)
    zhi = jnp.clip(jnp.floor(zmax) + 1.0, 0.0, float(D - 1)).astype(jnp.int32)
    row_lo = zlo * HW
    row_hi = (zhi + 1) * HW                                  # exclusive
    klo = (row_lo // tile_k).astype(jnp.int32)
    khi = ((row_hi + tile_k - 1) // tile_k).astype(jnp.int32)  # exclusive
    kcnt = jnp.where(empty, 0, khi - klo)
    kcnt = jnp.clip(kcnt, 0, MAXS).astype(jnp.int32)
    klo_flat = klo.reshape(-1)
    kcnt_flat = kcnt.reshape(-1)

    def kt_of(b, v, s, klo_ref):
        return jnp.minimum(klo_ref[b * NVt + v] + s, nk_tiles - 1)

    if resident:
        # K-tile-major layout so the kernel can index the tile on the first axis.
        src_in = src_flat.reshape(B, Cp, nk_tiles, tile_k).transpose(0, 2, 1, 3)
        src_spec = pl.BlockSpec((pl.Squeezed(), nk_tiles, Cp, tile_k),
                                lambda b, v, s, klo, kc: (b, 0, 0, 0))
    else:
        src_in = src_flat
        src_spec = pl.BlockSpec(
            (1, Cp, tile_k),
            lambda b, v, s, klo, kc: (b, 0, kt_of(b, v, s, klo)))
    gin_spec = pl.BlockSpec((tile_k, 3),
                            lambda b, v, s, klo, kc: (kt_of(b, v, s, klo), 0))

    kernel = partial(_st_kernel, nvt=NVt, nk_tiles=nk_tiles,
                     src_resident=resident, mxu_dtype=mxu_dtype,
                     mask_bf16=(mxu_dtype == jnp.bfloat16 and not is_v5e))

    out_flat = pl.pallas_call(
        kernel,
        out_shape=jax.ShapeDtypeStruct((B, Cp, NVp), src.dtype),
        grid_spec=pltpu.PrefetchScalarGridSpec(
            num_scalar_prefetch=2,
            grid=(B, NVt, MAXS),
            in_specs=[
                src_spec,                                                   # src
                pl.BlockSpec((1, 3, tile_v), lambda b, v, s, klo, kc: (b, 0, v)),  # flow
                pl.BlockSpec((3, tile_v), lambda b, v, s, klo, kc: (0, v)),        # grid (out view)
                gin_spec,                                                   # grid (in view)
            ],
            out_specs=pl.BlockSpec((1, Cp, tile_v),
                                   lambda b, v, s, klo, kc: (b, 0, v)),
            scratch_shapes=[pltpu.VMEM((Cp, tile_v), jnp.float32)],
        ),
        compiler_params=pltpu.CompilerParams(
            dimension_semantics=("parallel", "parallel", "arbitrary"),
            vmem_limit_bytes=vmem_limit,
        ),
    )(klo_flat, kcnt_flat, src_in, flow_flat, grid_out, grid_in)
    return out_flat[:, :C, :Nvox].reshape(B, C, D, H, W)


def _reference(src, flow):
    """Pure-JAX reference of grid_sample(align_corners=True, bilinear, zeros)."""
    B, C, D, H, W = src.shape
    gd = jnp.arange(D, dtype=jnp.float32)[:, None, None]
    gh = jnp.arange(H, dtype=jnp.float32)[None, :, None]
    gw = jnp.arange(W, dtype=jnp.float32)[None, None, :]
    zc = gd + flow[:, 0]
    yc = gh + flow[:, 1]
    xc = gw + flow[:, 2]
    z0, y0, x0 = jnp.floor(zc), jnp.floor(yc), jnp.floor(xc)
    src_flat = src.reshape(B, C, -1)
    out = jnp.zeros((B, C, D * H * W), jnp.float32)
    for dz, dy, dx in itertools.product((0, 1), (0, 1), (0, 1)):
        zi, yi, xi = z0 + dz, y0 + dy, x0 + dx
        wz = (zc - z0) if dz == 1 else (1.0 - (zc - z0))
        wy = (yc - y0) if dy == 1 else (1.0 - (yc - y0))
        wx = (xc - x0) if dx == 1 else (1.0 - (xc - x0))
        wgt = wz * wy * wx
        inb = ((zi >= 0) & (zi <= D - 1) & (yi >= 0) & (yi <= H - 1) &
               (xi >= 0) & (xi <= W - 1))
        zi_c = jnp.clip(zi, 0, D - 1).astype(jnp.int32)
        yi_c = jnp.clip(yi, 0, H - 1).astype(jnp.int32)
        xi_c = jnp.clip(xi, 0, W - 1).astype(jnp.int32)
        flat = (zi_c * H * W + yi_c * W + xi_c).reshape(B, -1)
        vals = jnp.take_along_axis(src_flat, flat[:, None, :], axis=2)
        out = out + vals * (wgt * inb.astype(jnp.float32)).reshape(B, 1, -1)
    return out.reshape(B, C, D, H, W)


if __name__ == "__main__":
    def run_case(B, C, D, H, W, seed, *, rtol, atol, clip=None, **kwargs):
        key = jax.random.fold_in(jax.random.PRNGKey(0), seed)
        k_src, k_flow = jax.random.split(key)
        src = jax.random.normal(k_src, (B, C, D, H, W), dtype=jnp.float32)
        flow = 2.0 * jax.random.normal(k_flow, (B, 3, D, H, W), dtype=jnp.float32)
        if clip is not None:  # bound the displacement when using max_disp
            flow = jnp.clip(flow, -clip, clip)
        out = jax.block_until_ready(
            spatial_transformer(src, flow, "bilinear", **kwargs))
        ref = jax.block_until_ready(_reference(src, flow))
        np.testing.assert_allclose(np.asarray(out), np.asarray(ref),
                                   rtol=rtol, atol=atol)

    # 1) Block-sparse K-window path (static max_disp bound), resident src,
    #    exact f32 MXU contraction at tight tolerance.
    run_case(1, 3, 16, 8, 8, seed=1, rtol=1e-4, atol=1e-4,
             clip=2.0, max_disp=2.0, tile_v=256, tile_k=128)
    # 2) Ragged volume exercising the padding path (Nvox=210 -> 256), full sweep.
    run_case(1, 2, 5, 6, 7, seed=2, rtol=1e-4, atol=1e-4)
    # 3) bf16 MXU path (quantized src + weights -> loose tolerance), full sweep.
    run_case(2, 4, 8, 8, 8, seed=3, rtol=5e-2, atol=8e-2,
             tile_v=256, tile_k=256, mxu_dtype=jnp.bfloat16)
    # 4) Streamed-src path with the data-dependent K-tile index_map.
    run_case(2, 4, 8, 8, 8, seed=4, rtol=1e-4, atol=1e-4,
             clip=3.0, max_disp=3.0, tile_v=256, tile_k=128, src_resident=False)
    print("KERNEL_OK")
</pallas_src>

<mosaic_0001>
module attributes {stable_mosaic.version = 11 : i64} {
  func.func @_st_kernel(%arg0: i32, %arg1: i32, %arg2: i32, %arg3: memref<4xi32, #tpu.memory_space<smem>>, %arg4: memref<4xi32, #tpu.memory_space<smem>>, %arg5: memref<1x8x8x128xf32, #tpu.memory_space<vmem>>, %arg6: memref<1x3x256xf32, #tpu.memory_space<vmem>>, %arg7: memref<3x256xf32, #tpu.memory_space<vmem>>, %arg8: memref<128x3xf32, #tpu.memory_space<vmem>>, %arg9: memref<1x8x256xf32, #tpu.memory_space<vmem>>, %arg10: memref<8x256xf32, #tpu.memory_space<vmem>>) attributes {dimension_semantics = [#tpu.dimension_semantics<parallel>, #tpu.dimension_semantics<parallel>, #tpu.dimension_semantics<arbitrary>], iteration_bounds = array<i64: 1, 4, 6>, scalar_prefetch = 2 : i64, scratch_operands = 1 : i64, tpu.core_type = #tpu.core_type<tc>, window_params = [{transform_indices = @transform_0, window_bounds = array<i64: 1, 8, 8, 128>}, {transform_indices = @transform_1, window_bounds = array<i64: 1, 3, 256>}, {transform_indices = @transform_2, window_bounds = array<i64: 3, 256>}, {transform_indices = @transform_3, window_bounds = array<i64: 128, 3>}, {transform_indices = @transform_4, window_bounds = array<i64: 1, 8, 256>}]} {
    %c4_i32 = arith.constant 4 : i32
    %0 = arith.muli %arg0, %c4_i32 : i32
    %1 = arith.addi %0, %arg1 : i32
    %c0_i32 = arith.constant 0 : i32
    %2 = arith.cmpi eq, %arg2, %c0_i32 : i32
    %3 = arith.extui %2 : i1 to i32
    %c0_i32_0 = arith.constant 0 : i32
    %4 = arith.cmpi ne, %3, %c0_i32_0 : i32
    scf.if %4 {
      %cst = arith.constant 0.000000e+00 : f32
      %13 = vector.broadcast %cst : f32 to vector<8x256xf32>
      %c0 = arith.constant 0 : index
      %c0_3 = arith.constant 0 : index
      %14 = vector.load %arg10[%c0, %c0_3] : memref<8x256xf32, #tpu.memory_space<vmem>>, vector<8x256xf32>
      tpu.vector_store %arg10[%c0, %c0_3], %13 {strides = array<i32>} : memref<8x256xf32, #tpu.memory_space<vmem>>, vector<8x256xf32>,
    } else {
    }
    %5 = arith.index_cast %1 : i32 to index
    %6 = memref.load %arg4[%5] : memref<4xi32, #tpu.memory_space<smem>>
    %7 = arith.cmpi slt, %arg2, %6 : i32
    %8 = arith.extui %7 : i1 to i32
    %c0_i32_1 = arith.constant 0 : i32
    %9 = arith.cmpi ne, %8, %c0_i32_1 : i32
    scf.if %9 {
      %c0 = arith.constant 0 : index
      %c0_3 = arith.constant 0 : index
      %c0_4 = arith.constant 0 : index
      %13 = vector.load %arg6[%c0, %c0_3, %c0_4] : memref<1x3x256xf32, #tpu.memory_space<vmem>>, vector<1x3x256xf32>
      %14 = vector.shape_cast %13 : vector<1x3x256xf32> to vector<3x256xf32>
      %c0_5 = arith.constant 0 : index
      %c0_6 = arith.constant 0 : index
      %15 = vector.load %arg7[%c0_5, %c0_6] : memref<3x256xf32, #tpu.memory_space<vmem>>, vector<3x256xf32>
      %16 = vector.extract_strided_slice %15 {offsets = [0, 0], sizes = [1, 256], strides = [1, 1]} : vector<3x256xf32> to vector<1x256xf32>
      %17 = vector.extract_strided_slice %14 {offsets = [0, 0], sizes = [1, 256], strides = [1, 1]} : vector<3x256xf32> to vector<1x256xf32>
      %18 = arith.addf %16, %17 : vector<1x256xf32>
      %19 = vector.extract_strided_slice %15 {offsets = [1, 0], sizes = [1, 256], strides = [1, 1]} : vector<3x256xf32> to vector<1x256xf32>
      %20 = vector.extract_strided_slice %14 {offsets = [1, 0], sizes = [1, 256], strides = [1, 1]} : vector<3x256xf32> to vector<1x256xf32>
      %21 = arith.addf %19, %20 : vector<1x256xf32>
      %22 = vector.extract_strided_slice %15 {offsets = [2, 0], sizes = [1, 256], strides = [1, 1]} : vector<3x256xf32> to vector<1x256xf32>
      %23 = vector.extract_strided_slice %14 {offsets = [2, 0], sizes = [1, 256], strides = [1, 1]} : vector<3x256xf32> to vector<1x256xf32>
      %24 = arith.addf %22, %23 : vector<1x256xf32>
      %c0_7 = arith.constant 0 : index
      %c0_8 = arith.constant 0 : index
      %25 = vector.load %arg8[%c0_7, %c0_8] : memref<128x3xf32, #tpu.memory_space<vmem>>, vector<128x1xf32>
      %c0_9 = arith.constant 0 : index
      %c1 = arith.constant 1 : index
      %26 = vector.load %arg8[%c0_9, %c1] : memref<128x3xf32, #tpu.memory_space<vmem>>, vector<128x1xf32>
      %c0_10 = arith.constant 0 : index
      %c2 = arith.constant 2 : index
      %27 = vector.load %arg8[%c0_10, %c2] : memref<128x3xf32, #tpu.memory_space<vmem>>, vector<128x1xf32>
      %28 = vector.broadcast %25 : vector<128x1xf32> to vector<128x256xf32>
      %29 = vector.broadcast %18 : vector<1x256xf32> to vector<128x256xf32>
      %30 = arith.subf %28, %29 : vector<128x256xf32>
      %31 = math.absf %30 : vector<128x256xf32>
      %cst = arith.constant 1.000000e+00 : f32
      %32 = vector.broadcast %cst : f32 to vector<128x256xf32>
      %33 = arith.subf %32, %31 : vector<128x256xf32>
      %cst_11 = arith.constant 0.000000e+00 : f32
      %34 = vector.broadcast %cst_11 : f32 to vector<128x256xf32>
      %35 = arith.maximumf %34, %33 : vector<128x256xf32>
      %36 = vector.broadcast %26 : vector<128x1xf32> to vector<128x256xf32>
      %37 = vector.broadcast %21 : vector<1x256xf32> to vector<128x256xf32>
      %38 = arith.subf %36, %37 : vector<128x256xf32>
      %39 = math.absf %38 : vector<128x256xf32>
      %cst_12 = arith.constant 1.000000e+00 : f32
      %40 = vector.broadcast %cst_12 : f32 to vector<128x256xf32>
      %41 = arith.subf %40, %39 : vector<128x256xf32>
      %cst_13 = arith.constant 0.000000e+00 : f32
      %42 = vector.broadcast %cst_13 : f32 to vector<128x256xf32>
      %43 = arith.maximumf %42, %41 : vector<128x256xf32>
      %44 = vector.broadcast %27 : vector<128x1xf32> to vector<128x256xf32>
      %45 = vector.broadcast %24 : vector<1x256xf32> to vector<128x256xf32>
      %46 = arith.subf %44, %45 : vector<128x256xf32>
      %47 = math.absf %46 : vector<128x256xf32>
      %cst_14 = arith.constant 1.000000e+00 : f32
      %48 = vector.broadcast %cst_14 : f32 to vector<128x256xf32>
      %49 = arith.subf %48, %47 : vector<128x256xf32>
      %cst_15 = arith.constant 0.000000e+00 : f32
      %50 = vector.broadcast %cst_15 : f32 to vector<128x256xf32>
      %51 = arith.maximumf %50, %49 : vector<128x256xf32>
      %52 = arith.mulf %35, %43 : vector<128x256xf32>
      %53 = arith.mulf %52, %51 : vector<128x256xf32>
      %54 = arith.index_cast %1 : i32 to index
      %55 = memref.load %arg3[%54] : memref<4xi32, #tpu.memory_space<smem>>
      %56 = arith.addi %55, %arg2 : i32
      %c7_i32 = arith.constant 7 : i32
      %57 = arith.minsi %56, %c7_i32 : i32
      %c0_16 = arith.constant 0 : index
      %58 = arith.index_cast %57 : i32 to index
      %c0_17 = arith.constant 0 : index
      %c0_18 = arith.constant 0 : index
      %59 = vector.load %arg5[%c0_16, %58, %c0_17, %c0_18] : memref<1x8x8x128xf32, #tpu.memory_space<vmem>>, vector<1x1x8x128xf32>
      %60 = vector.shape_cast %59 : vector<1x1x8x128xf32> to vector<8x128xf32>
      %c0_19 = arith.constant 0 : index
      %c0_20 = arith.constant 0 : index
      %61 = vector.load %arg10[%c0_19, %c0_20] : memref<8x256xf32, #tpu.memory_space<vmem>>, vector<8x256xf32>
      %cst_21 = arith.constant dense<0.000000e+00> : vector<8x256xf32>
      %62 = tpu.matmul %60, %53, %cst_21 {dimension_numbers = #tpu.dot_dimension_numbers<[1], [0], [0], [1], [0, 0, 1, 1], [], []>, precision = #tpu.contract_precision<fp32>} : vector<8x128xf32>, vector<128x256xf32>, vector<8x256xf32> -> vector<8x256xf32>
      %63 = arith.addf %61, %62 : vector<8x256xf32>
      %c0_22 = arith.constant 0 : index
      %c0_23 = arith.constant 0 : index
      %64 = vector.load %arg10[%c0_22, %c0_23] : memref<8x256xf32, #tpu.memory_space<vmem>>, vector<8x256xf32>
      tpu.vector_store %arg10[%c0_22, %c0_23], %63 {strides = array<i32>} : memref<8x256xf32, #tpu.memory_space<vmem>>, vector<8x256xf32>,
    } else {
    }
    %c5_i32 = arith.constant 5 : i32
    %10 = arith.cmpi eq, %arg2, %c5_i32 : i32
    %11 = arith.extui %10 : i1 to i32
    %c0_i32_2 = arith.constant 0 : i32
    %12 = arith.cmpi ne, %11, %c0_i32_2 : i32
    scf.if %12 {
      %c0 = arith.constant 0 : index
      %c0_3 = arith.constant 0 : index
      %13 = vector.load %arg10[%c0, %c0_3] : memref<8x256xf32, #tpu.memory_space<vmem>>, vector<8x256xf32>
      %c0_4 = arith.constant 0 : index
      %c0_5 = arith.constant 0 : index
      %c0_6 = arith.constant 0 : index
      %14 = vector.load %arg9[%c0_4, %c0_5, %c0_6] : memref<1x8x256xf32, #tpu.memory_space<vmem>>, vector<1x8x256xf32>
      %15 = vector.shape_cast %14 : vector<1x8x256xf32> to vector<8x256xf32>
      %16 = vector.shape_cast %13 : vector<8x256xf32> to vector<1x8x256xf32>
      tpu.vector_store %arg9[%c0_4, %c0_5, %c0_6], %16 {strides = array<i32>} : memref<1x8x256xf32, #tpu.memory_space<vmem>>, vector<1x8x256xf32>,
    } else {
    }
    return
  }
  func.func @transform_0(%arg0: i32, %arg1: i32, %arg2: i32, %arg3: memref<4xi32, #tpu.memory_space<smem>>, %arg4: memref<4xi32, #tpu.memory_space<smem>>) -> (i32, i32, i32, i32) {
    %c0_i32 = arith.constant 0 : i32
    %c0_i32_0 = arith.constant 0 : i32
    %c0_i32_1 = arith.constant 0 : i32
    %c0_i32_2 = arith.constant 0 : i32
    return %arg0, %c0_i32, %c0_i32_0, %c0_i32_1 : i32, i32, i32, i32
  }
  func.func @transform_1(%arg0: i32, %arg1: i32, %arg2: i32, %arg3: memref<4xi32, #tpu.memory_space<smem>>, %arg4: memref<4xi32, #tpu.memory_space<smem>>) -> (i32, i32, i32) {
    %c0_i32 = arith.constant 0 : i32
    %c0_i32_0 = arith.constant 0 : i32
    return %arg0, %c0_i32, %arg1 : i32, i32, i32
  }
  func.func @transform_2(%arg0: i32, %arg1: i32, %arg2: i32, %arg3: memref<4xi32, #tpu.memory_space<smem>>, %arg4: memref<4xi32, #tpu.memory_space<smem>>) -> (i32, i32) {
    %c0_i32 = arith.constant 0 : i32
    %c0_i32_0 = arith.constant 0 : i32
    return %c0_i32, %arg1 : i32, i32
  }
  func.func @transform_3(%arg0: i32, %arg1: i32, %arg2: i32, %arg3: memref<4xi32, #tpu.memory_space<smem>>, %arg4: memref<4xi32, #tpu.memory_space<smem>>) -> (i32, i32) {
    %c4_i32 = arith.constant 4 : i32
    %0 = arith.muli %arg0, %c4_i32 : i32
    %1 = arith.addi %0, %arg1 : i32
    %2 = arith.index_cast %1 : i32 to index
    %3 = memref.load %arg3[%2] : memref<4xi32, #tpu.memory_space<smem>>
    %4 = arith.addi %3, %arg2 : i32
    %c7_i32 = arith.constant 7 : i32
    %5 = arith.minsi %4, %c7_i32 : i32
    %c0_i32 = arith.constant 0 : i32
    %c0_i32_0 = arith.constant 0 : i32
    return %5, %c0_i32 : i32, i32
  }
  func.func @transform_4(%arg0: i32, %arg1: i32, %arg2: i32, %arg3: memref<4xi32, #tpu.memory_space<smem>>, %arg4: memref<4xi32, #tpu.memory_space<smem>>) -> (i32, i32, i32) {
    %c0_i32 = arith.constant 0 : i32
    %c0_i32_0 = arith.constant 0 : i32
    return %arg0, %c0_i32, %arg1 : i32, i32, i32
  }
}

</mosaic_0001>

<llo_original>
// kernel: tpu_custom_call.1
$region0: #{tpu_custom_call.1}
  #allocation0 [shape = 'u32[]', space=smem, size = 0x4, offset = 0x4, fixed_abs, tag = 'smem constant byte address 0x4 - core index']
  #allocation1 [shape = 'u32[72,128]{1,0:T(1,128)}', space=vmem, size = 0x9000, scoped, tag = 'internal scratch']
  #allocation2 [shape = 'f32[8,256]{1,0:T(8,128)}', space=vmem, size = 0x2000, scoped, tag = 'scratch operand']
  #allocation3 [shape = 's32[1]{0}', space=sflag, size = 0x4, scoped, tag = 'scoped memory for tpu_custom_call.1']
  #allocation4 [shape = 'u8[512]{0}', space=smem, size = 0x200, scoped, tag = 'prefetched SMEM operand 0']
  #allocation5 [shape = 'u8[512]{0}', space=smem, size = 0x200, scoped, tag = 'prefetched SMEM operand 1']
  %s0 = inlined_call_operand.vmem [shape: s32[4], index: 0, kind: input, shape index: {}]
  %s1 = inlined_call_operand.vmem [shape: s32[4], index: 1, kind: input, shape index: {}]
  %s2 = inlined_call_operand.vmem [shape: f32[1,8,8,128], index: 2, kind: input, shape index: {}]
  %s3 = inlined_call_operand.vmem [shape: f32[1,3,1024], index: 3, kind: input, shape index: {}]
  %s4 = inlined_call_operand.vmem [shape: f32[3,1024], index: 4, kind: input, shape index: {}]
  %s5 = inlined_call_operand.vmem [shape: f32[1024,3], index: 5, kind: input, shape index: {}]
  %s6 = inlined_call_operand.hbm [shape: f32[1,8,1024], index: 6, kind: output, shape index: {}]
  %s7 = sld [smem:[#allocation0]]
  $region61: #{tpu_custom_call.1} parent=0
    _
  %s9 = ssub.s32 1, %s7
  %s10 = scalar_select 0, %s9, %s7
  %s12 = sshll.u32 %s0, 4
  %s13 = int_to_ptr.vmem [resolvable:$true] %s12
  %15 = dma.vmem_to_smem %s13, 16, [#allocation4], [#allocation3]
  %s17 = sshll.u32 %s1, 4
  %s18 = int_to_ptr.vmem [resolvable:$true] %s17
  %20 = dma.vmem_to_smem %s18, 16, [#allocation5], [#allocation3]
  %22 = dma.done [#allocation3], 32
  %23 = sfence
  $region1: #{tpu_custom_call.1} parent=0
    #allocation6 [shape = 'u8[16384]{0}', space=vmem, size = 0x4000, scoped, tag = 'output window, operand 0']
    #allocation7 [shape = 's32[2]{0}', space=sflag, size = 0x8, scoped, tag = 'scoped memory for tpu_custom_call.1']
    %24 = vsyncpa [#allocation7], 0
    %s25 = scalar_lea.sflag [#allocation7], 1
    %26 = vsyncpa %s25, 0
    loop: start=0, step=1, limit=26
    $region2: #{tpu_custom_call.1} parent=1 // loop_pre_header
      _
    $region3: #{tpu_custom_call.1} parent=1 // loop_header
      %s28 = sphi 0, %s32
      %p29 = scmp.ge.s32.totalorder %s28, 26
      %s35 = sphi 0, %s54
      %s36 = sphi 0, %s50
      %s37 = sphi 0, %s46
      %s38 = sphi 0, %s35
      %s39 = sphi 0, %s36
      %s40 = sphi 0, %s37
      %s41 = sphi 0, %s38
      %s42 = sphi 0, %s39
      %s43 = sphi 0, %s40
      %s57 = sphi 0, %s59
      %s60 = sphi 0, %s57
      %s61 = sphi 0, %s60
      %s77 = sphi 0, %s61
      %s85 = sphi 0, %s87
      %s88 = sphi 0, %s85
      %s89 = sphi 0, %s88
      %s105 = sphi 0, %s89
      %s111 = sphi 0, %s113
      %s114 = sphi 0, %s111
      %s115 = sphi 0, %s114
      %s131 = sphi 0, %s115
      %s149 = sphi 0, %s151
      %s152 = sphi 0, %s149
      %s153 = sphi 0, %s152
      %s169 = sphi 0, %s153
      %s177 = sphi 0, %s179
      %s180 = sphi 0, %s177
      %s181 = sphi 0, %s180
      %s197 = sphi 0, %s181
    $region4: #{tpu_custom_call.1} parent=1 // loop_header_branch
      %31 = sbr.rel (%p29) target = $region8
    $region5: #{tpu_custom_call.1} parent=1 // loop_body
      %s33 = ssub.s32 %s28, 1
      %s34 = ssub.s32 %s28, 2
      %s44 = sadd.s32 1, %s37
      %p45 = scmp.ge.s32.totalorder %s44, 6
      %s46 = scalar_select %p45, 0, %s44
      %s47 = sadd.s32 1, %s36
      %s48 = scalar_select %p45, %s47, %s36
      %p49 = scmp.ge.s32.totalorder %s48, 4
      %s50 = scalar_select %p49, 0, %s48
      %s51 = sadd.s32 1, %s35
      %s52 = scalar_select %p49, %s51, %s35
      %p53 = scmp.ge.s32.totalorder %s52, 1
      %s54 = scalar_select %p53, 0, %s52
      %s55 = ssub.s32 %s35, %s54
      %p56 = scmp.eq.s32.totalorder %s55, 0
      %s58 = sadd.s32 %s57, 1
      %s59 = scalar_select %p56, %s57, %s58
      %p62 = pneg %p56
      %p63 = scmp.eq.s32.totalorder %s28, 23
      %p64 = por %p62, %p63
      %p65 = scmp.ne.s32.totalorder %s57, %s60
      %p66 = scmp.eq.s32.totalorder %s28, 0
      %p67 = por %p65, %p66
      %p68 = scmp.ne.s32.totalorder %s57, %s60
      %p69 = scmp.eq.s32.totalorder %s33, 23
      %p70 = por %p68, %p69
      %p71 = scmp.ne.s32.totalorder %s60, %s61
      %p72 = scmp.eq.s32.totalorder %s33, 0
      %p73 = por %p71, %p72
      %p74 = scmp.ne.s32.totalorder %s60, %s61
      %p75 = scmp.eq.s32.totalorder %s34, 23
      %p76 = por %p74, %p75
      %p78 = scmp.ne.s32.totalorder %s61, %s77
      %p79 = scmp.eq.s32.totalorder %s34, 0
      %p80 = por %p78, %p79
      %s81 = ssub.s32 %s35, %s54
      %s82 = ssub.s32 %s36, %s50
      %s83 = sor.u32 %s81, %s82
      %p84 = scmp.eq.s32.totalorder %s83, 0
      %s86 = sadd.s32 %s85, 1
      %s87 = scalar_select %p84, %s85, %s86
      %p90 = pneg %p84
      %p91 = scmp.eq.s32.totalorder %s28, 23
      %p92 = por %p90, %p91
      %p93 = scmp.ne.s32.totalorder %s85, %s88
      %p94 = scmp.eq.s32.totalorder %s28, 0
      %p95 = por %p93, %p94
      %p96 = scmp.ne.s32.totalorder %s85, %s88
      %p97 = scmp.eq.s32.totalorder %s33, 23
      %p98 = por %p96, %p97
      %p99 = scmp.ne.s32.totalorder %s88, %s89
      %p100 = scmp.eq.s32.totalorder %s33, 0
      %p101 = por %p99, %p100
      %p102 = scmp.ne.s32.totalorder %s88, %s89
      %p103 = scmp.eq.s32.totalorder %s34, 23
      %p104 = por %p102, %p103
      %p106 = scmp.ne.s32.totalorder %s89, %s105
      %p107 = scmp.eq.s32.totalorder %s34, 0
      %p108 = por %p106, %p107
      %s109 = ssub.s32 %s36, %s50
      %p110 = scmp.eq.s32.totalorder %s109, 0
      %s112 = sadd.s32 %s111, 1
      %s113 = scalar_select %p110, %s111, %s112
      %p116 = pneg %p110
      %p117 = scmp.eq.s32.totalorder %s28, 23
      %p118 = por %p116, %p117
      %p119 = scmp.ne.s32.totalorder %s111, %s114
      %p120 = scmp.eq.s32.totalorder %s28, 0
      %p121 = por %p119, %p120
      %p122 = scmp.ne.s32.totalorder %s111, %s114
      %p123 = scmp.eq.s32.totalorder %s33, 23
      %p124 = por %p122, %p123
      %p125 = scmp.ne.s32.totalorder %s114, %s115
      %p126 = scmp.eq.s32.totalorder %s33, 0
      %p127 = por %p125, %p126
      %p128 = scmp.ne.s32.totalorder %s114, %s115
      %p129 = scmp.eq.s32.totalorder %s34, 23
      %p130 = por %p128, %p129
      %p132 = scmp.ne.s32.totalorder %s115, %s131
      %p133 = scmp.eq.s32.totalorder %s34, 0
      %p134 = por %p132, %p133
      %s135 = smul.u32 %s35, 4
      %s136 = sadd.s32 %s135, %s36
      %s137 = sld [smem:[#allocation4 + %s136]]
      %s138 = sadd.s32 %s137, %s37
      %p139 = scmp.lt.s32.totalorder %s138, 7
      %s140 = scalar_select %p139, %s138, 7
      %s141 = smul.u32 %s54, 4
      %s142 = sadd.s32 %s141, %s50
      %s143 = sld [smem:[#allocation4 + %s142]]
      %s144 = sadd.s32 %s143, %s46
      %p145 = scmp.lt.s32.totalorder %s144, 7
      %s146 = scalar_select %p145, %s144, 7
      %s147 = ssub.s32 %s140, %s146
      %p148 = scmp.eq.s32.totalorder %s147, 0
      %s150 = sadd.s32 %s149, 1
      %s151 = scalar_select %p148, %s149, %s150
      %p154 = pneg %p148
      %p155 = scmp.eq.s32.totalorder %s28, 23
      %p156 = por %p154, %p155
      %p157 = scmp.ne.s32.totalorder %s149, %s152
      %p158 = scmp.eq.s32.totalorder %s28, 0
      %p159 = por %p157, %p158
      %p160 = scmp.ne.s32.totalorder %s149, %s152
      %p161 = scmp.eq.s32.totalorder %s33, 23
      %p162 = por %p160, %p161
      %p163 = scmp.ne.s32.totalorder %s152, %s153
      %p164 = scmp.eq.s32.totalorder %s33, 0
      %p165 = por %p163, %p164
      %p166 = scmp.ne.s32.totalorder %s152, %s153
      %p167 = scmp.eq.s32.totalorder %s34, 23
      %p168 = por %p166, %p167
      %p170 = scmp.ne.s32.totalorder %s153, %s169
      %p171 = scmp.eq.s32.totalorder %s34, 0
      %p172 = por %p170, %p171
      %s173 = ssub.s32 %s35, %s54
      %s174 = ssub.s32 %s36, %s50
      %s175 = sor.u32 %s173, %s174
      %p176 = scmp.eq.s32.totalorder %s175, 0
      %s178 = sadd.s32 %s177, 1
      %s179 = scalar_select %p176, %s177, %s178
      %p182 = pneg %p176
      %p183 = scmp.eq.s32.totalorder %s28, 23
      %p184 = por %p182, %p183
      %p185 = scmp.ne.s32.totalorder %s177, %s180
      %p186 = scmp.eq.s32.totalorder %s28, 0
      %p187 = por %p185, %p186
      %p188 = scmp.ne.s32.totalorder %s177, %s180
      %p189 = scmp.eq.s32.totalorder %s33, 23
      %p190 = por %p188, %p189
      %p191 = scmp.ne.s32.totalorder %s180, %s181
      %p192 = scmp.eq.s32.totalorder %s33, 0
      %p193 = por %p191, %p192
      %p194 = scmp.ne.s32.totalorder %s180, %s181
      %p195 = scmp.eq.s32.totalorder %s34, 23
      %p196 = por %p194, %p195
      %p198 = scmp.ne.s32.totalorder %s181, %s197
      %p199 = scmp.eq.s32.totalorder %s34, 0
      %p200 = por %p198, %p199
      %p201 = scmp.le.s32.totalorder 1, %s28
      %p202 = scmp.lt.s32.totalorder %s28, 25
      %p203 = pnand %p201, %p202
      %p204 = pneg %p203
      // Predicated region
      $region9: #{tpu_custom_call.1} parent=5 // pred_check
        _
      $region10: #{tpu_custom_call.1} parent=5 // pred_check_branch
        %206 = sbr.rel (%p203) target = $region12
      $region11: #{tpu_custom_call.1} parent=5 // pred_region
        %s207 = ssub.s32 %s28, 1
        // Predicated region
        $region13: #{tpu_custom_call.1} parent=11 // pred_check
          %p208 = pneg %p73
        $region14: #{tpu_custom_call.1} parent=11 // pred_check_branch
          %210 = sbr.rel (%p208) target = $region16
        $region15: #{tpu_custom_call.1} parent=11 // pred_region
          %p211 = scmp.lt.s32.totalorder %s38, 0
          %s212 = scalar_select %p211, %s38, 0
          %s213 = smul.addr %s212, 8
          %s214 = smul.addr %s213, 8
          %s215 = scalar_lea.vmem %s2, %s214
        $region16: #{tpu_custom_call.1} parent=11 // pred_fallthru
          _
      $region12: #{tpu_custom_call.1} parent=5 // pred_fallthru
        _
      %p216 = scmp.lt.s32.totalorder %s28, 24
      // Predicated region
      $region17: #{tpu_custom_call.1} parent=5 // pred_check
        %p217 = pneg %p216
      $region18: #{tpu_custom_call.1} parent=5 // pred_check_branch
        %219 = sbr.rel (%p217) target = $region20
      $region19: #{tpu_custom_call.1} parent=5 // pred_region
        // Predicated region
        $region21: #{tpu_custom_call.1} parent=19 // pred_check
          %p220 = pneg %p95
        $region22: #{tpu_custom_call.1} parent=19 // pred_check_branch
          %222 = sbr.rel (%p220) target = $region24
        $region23: #{tpu_custom_call.1} parent=19 // pred_region
          %s223 = smul.u32 2, %s36
          %p224 = scmp.lt.s32.totalorder %s35, 0
          %s225 = scalar_select %p224, %s35, 0
          %p226 = scmp.lt.s32.totalorder %s223, 7
          %s227 = scalar_select %p226, %s223, 7
          %s228 = smul.addr %s225, 8
          %s229 = sadd.s32 %s227, %s228
          %s230 = smul.addr %s229, 4
          %s231 = scalar_lea.vmem %s3, %s230
          %s232 = smul.u32 2, %s36
        $region24: #{tpu_custom_call.1} parent=19 // pred_fallthru
          _
        // Predicated region
        $region25: #{tpu_custom_call.1} parent=19 // pred_check
          %p233 = pneg %p121
        $region26: #{tpu_custom_call.1} parent=19 // pred_check_branch
          %235 = sbr.rel (%p233) target = $region28
        $region27: #{tpu_custom_call.1} parent=19 // pred_region
          %s236 = smul.u32 2, %s36
          %p237 = scmp.lt.s32.totalorder %s236, 7
          %s238 = scalar_select %p237, %s236, 7
          %s239 = smul.addr %s238, 4
          %s240 = scalar_lea.vmem %s4, %s239
          %s241 = smul.u32 2, %s36
        $region28: #{tpu_custom_call.1} parent=19 // pred_fallthru
          _
        // Predicated region
        $region29: #{tpu_custom_call.1} parent=19 // pred_check
          %p242 = pneg %p159
        $region30: #{tpu_custom_call.1} parent=19 // pred_check_branch
          %244 = sbr.rel (%p242) target = $region32
        $region31: #{tpu_custom_call.1} parent=19 // pred_region
          %s245 = smul.u32 %s35, 4
          %s246 = sadd.s32 %s245, %s36
          %s247 = sld [smem:[#allocation4 + %s246]]
          %s248 = sadd.s32 %s247, %s37
          %p249 = scmp.lt.s32.totalorder %s248, 7
          %s250 = scalar_select %p249, %s248, 7
          %s251 = smul.u32 16, %s250
          %p252 = scmp.lt.s32.totalorder %s251, 127
          %s253 = scalar_select %p252, %s251, 127
          %s254 = smul.addr %s253, 8
          %s255 = scalar_lea.vmem %s5, %s254
          %s256 = smul.u32 %s35, 4
          %s257 = sadd.s32 %s256, %s36
          %s258 = sld [smem:[#allocation4 + %s257]]
          %s259 = sadd.s32 %s258, %s37
          %p260 = scmp.lt.s32.totalorder %s259, 7
          %s261 = scalar_select %p260, %s259, 7
          %s262 = smul.u32 16, %s261
        $region32: #{tpu_custom_call.1} parent=19 // pred_fallthru
          _
      $region20: #{tpu_custom_call.1} parent=5 // pred_fallthru
        _
      %p263 = scmp.le.s32.totalorder 1, %s28
      %p264 = scmp.lt.s32.totalorder %s28, 25
      %p265 = pnand %p263, %p264
      %p266 = pneg %p265
      // Predicated region
      $region33: #{tpu_custom_call.1} parent=5 // pred_check
        _
      $region34: #{tpu_custom_call.1} parent=5 // pred_check_branch
        %268 = sbr.rel (%p265) target = $region36
      $region35: #{tpu_custom_call.1} parent=5 // pred_region
        %s269 = ssub.s32 %s28, 1
        %p270 = scmp.lt.s32.totalorder %s38, 0
        %s271 = scalar_select %p270, %s38, 0
        %s272 = smul.addr %s271, 8
        %s273 = smul.addr %s272, 8
        %s274 = scalar_lea.vmem %s2, %s273
        %p275 = pneg %p73
        %p276 = pneg %p70
        %s277 = smul.u32 2, %s39
        %p278 = scmp.lt.s32.totalorder %s38, 0
        %s279 = scalar_select %p278, %s38, 0
        %p280 = scmp.lt.s32.totalorder %s277, 7
        %s281 = scalar_select %p280, %s277, 7
        %s282 = smul.addr %s279, 8
        %s283 = sadd.s32 %s281, %s282
        %s284 = smul.addr %s283, 4
        %s285 = scalar_lea.vmem %s3, %s284
        %p286 = pneg %p101
        %p287 = pneg %p98
        %s288 = smul.u32 2, %s39
        %p289 = scmp.lt.s32.totalorder %s288, 7
        %s290 = scalar_select %p289, %s288, 7
        %s291 = smul.addr %s290, 4
        %s292 = scalar_lea.vmem %s4, %s291
        %p293 = pneg %p127
        %p294 = pneg %p124
        %s295 = smul.u32 %s38, 4
        %s296 = sadd.s32 %s295, %s39
        %s297 = sld [smem:[#allocation4 + %s296]]
        %s298 = sadd.s32 %s297, %s40
        %p299 = scmp.lt.s32.totalorder %s298, 7
        %s300 = scalar_select %p299, %s298, 7
        %s301 = smul.u32 16, %s300
        %p302 = scmp.lt.s32.totalorder %s301, 127
        %s303 = scalar_select %p302, %s301, 127
        %s304 = smul.addr %s303, 8
        %s305 = scalar_lea.vmem %s5, %s304
        %p306 = pneg %p165
        %p307 = pneg %p162
        %p308 = pneg %p193
        %p309 = pneg %p190
        %s310 = sand.u32 %s180, 1
        %s311 = scalar_lea.sflag [#allocation7], %s310
        %s312 = sand.u32 %s180, 1
        %s313 = smul.addr %s312, 16
        %s314 = scalar_lea.vmem [#allocation6], %s313
        %p315 = scmp.lt.s32.totalorder %s38, 0
        %s316 = scalar_select %p315, %s38, 0
        %s317 = smul.addr %s316, 8
        %s318 = smul.addr %s317, 8
        %s319 = scalar_lea.vmem %s2, %s318
        %s320 = smul.u32 2, %s39
        %p321 = scmp.lt.s32.totalorder %s38, 0
        %s322 = scalar_select %p321, %s38, 0
        %p323 = scmp.lt.s32.totalorder %s320, 7
        %s324 = scalar_select %p323, %s320, 7
        %s325 = smul.addr %s322, 8
        %s326 = sadd.s32 %s324, %s325
        %s327 = smul.addr %s326, 4
        %s328 = scalar_lea.vmem %s3, %s327
        %s329 = smul.u32 2, %s39
        %s330 = smul.u32 2, %s39
        %p331 = scmp.lt.s32.totalorder %s330, 7
        %s332 = scalar_select %p331, %s330, 7
        %s333 = smul.addr %s332, 4
        %s334 = scalar_lea.vmem %s4, %s333
        %s335 = smul.u32 2, %s39
        %s336 = smul.u32 %s38, 4
        %s337 = sadd.s32 %s336, %s39
        %s338 = sld [smem:[#allocation4 + %s337]]
        %s339 = sadd.s32 %s338, %s40
        %p340 = scmp.lt.s32.totalorder %s339, 7
        %s341 = scalar_select %p340, %s339, 7
        %s342 = smul.u32 16, %s341
        %p343 = scmp.lt.s32.totalorder %s342, 127
        %s344 = scalar_select %p343, %s342, 127
        %s345 = smul.addr %s344, 8
        %s346 = scalar_lea.vmem %s5, %s345
        %s347 = smul.u32 %s38, 4
        %s348 = sadd.s32 %s347, %s39
        %s349 = sld [smem:[#allocation4 + %s348]]
        %s350 = sadd.s32 %s349, %s40
        %p351 = scmp.lt.s32.totalorder %s350, 7
        %s352 = scalar_select %p351, %s350, 7
        %s353 = smul.u32 16, %s352
        %s354 = smul.u32 2, %s39
        %s355 = smul.u32 %s38, 4
        %s356 = sadd.s32 %s355, %s39
        %p357 = scmp.eq.s32.totalorder %s40, 0
        // Predicated region
        $region37: #{tpu_custom_call.1} parent=35 // pred_check
          %p358 = pneg %p357
        $region38: #{tpu_custom_call.1} parent=35 // pred_check_branch
          %360 = sbr.rel (%p358) target = $region40
        $region39: #{tpu_custom_call.1} parent=35 // pred_region
          %361 = vst [vmem:[#allocation2] sm:$0xff] 0.0
          %362 = vst [vmem:[#allocation2 + $0x8] sm:$0xff] 0.0
        $region40: #{tpu_custom_call.1} parent=35 // pred_fallthru
          _
        %s363 = sld [smem:[#allocation5 + %s356]]
        %p364 = scmp.lt.s32.totalorder %s40, %s363
        // Predicated region
        $region41: #{tpu_custom_call.1} parent=35 // pred_check
          %p365 = pneg %p364
        $region42: #{tpu_custom_call.1} parent=35 // pred_check_branch
          %367 = sbr.rel (%p365) target = $region44
        $region43: #{tpu_custom_call.1} parent=35 // pred_region
          %v368 = vld [vmem:[%s328] sm:$0x77]
          %v369 = vld [vmem:[%s334] sm:$0x77]
          %v370 = vadd.f32 %v369, %v368
          %v371 = vld [vmem:[%s346] sm:$0xff]
          %v372 = vld [vmem:[%s346 + $0x8] sm:$0xff]
          %v373 = vld [vmem:[%s346 + $0x10] sm:$0xff]
          %v374 = vld [vmem:[%s346 + $0x18] sm:$0xff]
          %v375 = vld [vmem:[%s346 + $0x20] sm:$0xff]
          %v376 = vld [vmem:[%s346 + $0x28] sm:$0xff]
          %v377 = vld [vmem:[%s346 + $0x30] sm:$0xff]
          %v378 = vld [vmem:[%s346 + $0x38] sm:$0xff]
          %v379 = vld [vmem:[%s346 + $0x40] sm:$0xff]
          %v380 = vld [vmem:[%s346 + $0x48] sm:$0xff]
          %v381 = vld [vmem:[%s346 + $0x50] sm:$0xff]
          %v382 = vld [vmem:[%s346 + $0x58] sm:$0xff]
          %v383 = vld [vmem:[%s346 + $0x60] sm:$0xff]
          %v384 = vld [vmem:[%s346 + $0x68] sm:$0xff]
          %v385 = vld [vmem:[%s346 + $0x70] sm:$0xff]
          %v386 = vld [vmem:[%s346 + $0x78] sm:$0xff]
          %388 = vset.pattern.permute.xlu0 0
          %389 = vperm.xlu0 %388, %v371
          %v390 = vpop.permute.xlu0 %389
          %393 = vset.pattern.permute.xlu0 0
          %394 = vperm.xlu0 %393, %v372
          %v395 = vpop.permute.xlu0 %394
          %398 = vset.pattern.permute.xlu0 0
          %399 = vperm.xlu0 %398, %v373
          %v400 = vpop.permute.xlu0 %399
          %403 = vset.pattern.permute.xlu0 0
          %404 = vperm.xlu0 %403, %v374
          %v405 = vpop.permute.xlu0 %404
          %408 = vset.pattern.permute.xlu0 0
          %409 = vperm.xlu0 %408, %v375
          %v410 = vpop.permute.xlu0 %409
          %413 = vset.pattern.permute.xlu0 0
          %414 = vperm.xlu0 %413, %v376
          %v415 = vpop.permute.xlu0 %414
          %418 = vset.pattern.permute.xlu0 0
          %419 = vperm.xlu0 %418, %v377
          %v420 = vpop.permute.xlu0 %419
          %423 = vset.pattern.permute.xlu0 0
          %424 = vperm.xlu0 %423, %v378
          %v425 = vpop.permute.xlu0 %424
          %428 = vset.pattern.permute.xlu0 0
          %429 = vperm.xlu0 %428, %v379
          %v430 = vpop.permute.xlu0 %429
          %433 = vset.pattern.permute.xlu0 0
          %434 = vperm.xlu0 %433, %v380
          %v435 = vpop.permute.xlu0 %434
          %438 = vset.pattern.permute.xlu0 0
          %439 = vperm.xlu0 %438, %v381
          %v440 = vpop.permute.xlu0 %439
          %443 = vset.pattern.permute.xlu0 0
          %444 = vperm.xlu0 %443, %v382
          %v445 = vpop.permute.xlu0 %444
          %448 = vset.pattern.permute.xlu0 0
          %449 = vperm.xlu0 %448, %v383
          %v450 = vpop.permute.xlu0 %449
          %453 = vset.pattern.permute.xlu0 0
          %454 = vperm.xlu0 %453, %v384
          %v455 = vpop.permute.xlu0 %454
          %458 = vset.pattern.permute.xlu0 0
          %459 = vperm.xlu0 %458, %v385
          %v460 = vpop.permute.xlu0 %459
          %463 = vset.pattern.permute.xlu0 0
          %464 = vperm.xlu0 %463, %v386
          %v465 = vpop.permute.xlu0 %464
          %v468 = vperm.slane %v370, 0
          %v469 = vperm.slane %v370, 4
          %v472 = vperm.slane %v468, 0
          %v473 = vperm.slane %v469, 0
          %v474 = vsub.f32 %v390, %v472
          %v475 = vsub.f32 %v390, %v473
          %v476 = vsub.f32 %v395, %v472
          %v477 = vsub.f32 %v395, %v473
          %v478 = vsub.f32 %v400, %v472
          %v479 = vsub.f32 %v400, %v473
          %v480 = vsub.f32 %v405, %v472
          %v481 = vsub.f32 %v405, %v473
          %v482 = vsub.f32 %v410, %v472
          %v483 = vsub.f32 %v410, %v473
          %v484 = vsub.f32 %v415, %v472
          %v485 = vsub.f32 %v415, %v473
          %v486 = vsub.f32 %v420, %v472
          %v487 = vsub.f32 %v420, %v473
          %v488 = vsub.f32 %v425, %v472
          %v489 = vsub.f32 %v425, %v473
          %v490 = vsub.f32 %v430, %v472
          %v491 = vsub.f32 %v430, %v473
          %v492 = vsub.f32 %v435, %v472
          %v493 = vsub.f32 %v435, %v473
          %v494 = vsub.f32 %v440, %v472
          %v495 = vsub.f32 %v440, %v473
          %v496 = vsub.f32 %v445, %v472
          %v497 = vsub.f32 %v445, %v473
          %v498 = vsub.f32 %v450, %v472
          %v499 = vsub.f32 %v450, %v473
          %v500 = vsub.f32 %v455, %v472
          %v501 = vsub.f32 %v455, %v473
          %v502 = vsub.f32 %v460, %v472
          %v503 = vsub.f32 %v460, %v473
          %v504 = vsub.f32 %v465, %v472
          %v505 = vsub.f32 %v465, %v473
          %v506 = vand.u32 2147483647, %v474
          %v507 = vand.u32 2147483647, %v475
          %v508 = vand.u32 2147483647, %v476
          %v509 = vand.u32 2147483647, %v477
          %v510 = vand.u32 2147483647, %v478
          %v511 = vand.u32 2147483647, %v479
          %v512 = vand.u32 2147483647, %v480
          %v513 = vand.u32 2147483647, %v481
          %v514 = vand.u32 2147483647, %v482
          %v515 = vand.u32 2147483647, %v483
          %v516 = vand.u32 2147483647, %v484
          %v517 = vand.u32 2147483647, %v485
          %v518 = vand.u32 2147483647, %v486
          %v519 = vand.u32 2147483647, %v487
          %v520 = vand.u32 2147483647, %v488
          %v521 = vand.u32 2147483647, %v489
          %v522 = vand.u32 2147483647, %v490
          %v523 = vand.u32 2147483647, %v491
          %v524 = vand.u32 2147483647, %v492
          %v525 = vand.u32 2147483647, %v493
          %v526 = vand.u32 2147483647, %v494
          %v527 = vand.u32 2147483647, %v495
          %v528 = vand.u32 2147483647, %v496
          %v529 = vand.u32 2147483647, %v497
          %v530 = vand.u32 2147483647, %v498
          %v531 = vand.u32 2147483647, %v499
          %v532 = vand.u32 2147483647, %v500
          %v533 = vand.u32 2147483647, %v501
          %v534 = vand.u32 2147483647, %v502
          %v535 = vand.u32 2147483647, %v503
          %v536 = vand.u32 2147483647, %v504
          %v537 = vand.u32 2147483647, %v505
          %v538 = vsub.f32 1.0, %v506
          %v539 = vsub.f32 1.0, %v507
          %v540 = vsub.f32 1.0, %v508
          %v541 = vsub.f32 1.0, %v509
          %v542 = vsub.f32 1.0, %v510
          %v543 = vsub.f32 1.0, %v511
          %v544 = vsub.f32 1.0, %v512
          %v545 = vsub.f32 1.0, %v513
          %v546 = vsub.f32 1.0, %v514
          %v547 = vsub.f32 1.0, %v515
          %v548 = vsub.f32 1.0, %v516
          %v549 = vsub.f32 1.0, %v517
          %v550 = vsub.f32 1.0, %v518
          %v551 = vsub.f32 1.0, %v519
          %v552 = vsub.f32 1.0, %v520
          %v553 = vsub.f32 1.0, %v521
          %v554 = vsub.f32 1.0, %v522
          %v555 = vsub.f32 1.0, %v523
          %v556 = vsub.f32 1.0, %v524
          %v557 = vsub.f32 1.0, %v525
          %v558 = vsub.f32 1.0, %v526
          %v559 = vsub.f32 1.0, %v527
          %v560 = vsub.f32 1.0, %v528
          %v561 = vsub.f32 1.0, %v529
          %v562 = vsub.f32 1.0, %v530
          %v563 = vsub.f32 1.0, %v531
          %v564 = vsub.f32 1.0, %v532
          %v565 = vsub.f32 1.0, %v533
          %v566 = vsub.f32 1.0, %v534
          %v567 = vsub.f32 1.0, %v535
          %v568 = vsub.f32 1.0, %v536
          %v569 = vsub.f32 1.0, %v537
          %v570 = vmax.f32 %v538, 0.0
          %v571 = vmax.f32 %v539, 0.0
          %v572 = vmax.f32 %v540, 0.0
          %v573 = vmax.f32 %v541, 0.0
          %v574 = vmax.f32 %v542, 0.0
          %v575 = vmax.f32 %v543, 0.0
          %v576 = vmax.f32 %v544, 0.0
          %v577 = vmax.f32 %v545, 0.0
          %v578 = vmax.f32 %v546, 0.0
          %v579 = vmax.f32 %v547, 0.0
          %v580 = vmax.f32 %v548, 0.0
          %v581 = vmax.f32 %v549, 0.0
          %v582 = vmax.f32 %v550, 0.0
          %v583 = vmax.f32 %v551, 0.0
          %v584 = vmax.f32 %v552, 0.0
          %v585 = vmax.f32 %v553, 0.0
          %v586 = vmax.f32 %v554, 0.0
          %v587 = vmax.f32 %v555, 0.0
          %v588 = vmax.f32 %v556, 0.0
          %v589 = vmax.f32 %v557, 0.0
          %v590 = vmax.f32 %v558, 0.0
          %v591 = vmax.f32 %v559, 0.0
          %v592 = vmax.f32 %v560, 0.0
          %v593 = vmax.f32 %v561, 0.0
          %v594 = vmax.f32 %v562, 0.0
          %v595 = vmax.f32 %v563, 0.0
          %v596 = vmax.f32 %v564, 0.0
          %v597 = vmax.f32 %v565, 0.0
          %v598 = vmax.f32 %v566, 0.0
          %v599 = vmax.f32 %v567, 0.0
          %v600 = vmax.f32 %v568, 0.0
          %v601 = vmax.f32 %v569, 0.0
          %602 = vset.pattern.permute.xlu0 1
          %603 = vperm.xlu0 %602, %v371
          %v604 = vpop.permute.xlu0 %603
          %606 = vset.pattern.permute.xlu0 1
          %607 = vperm.xlu0 %606, %v372
          %v608 = vpop.permute.xlu0 %607
          %610 = vset.pattern.permute.xlu0 1
          %611 = vperm.xlu0 %610, %v373
          %v612 = vpop.permute.xlu0 %611
          %614 = vset.pattern.permute.xlu0 1
          %615 = vperm.xlu0 %614, %v374
          %v616 = vpop.permute.xlu0 %615
          %618 = vset.pattern.permute.xlu0 1
          %619 = vperm.xlu0 %618, %v375
          %v620 = vpop.permute.xlu0 %619
          %622 = vset.pattern.permute.xlu0 1
          %623 = vperm.xlu0 %622, %v376
          %v624 = vpop.permute.xlu0 %623
          %626 = vset.pattern.permute.xlu0 1
          %627 = vperm.xlu0 %626, %v377
          %v628 = vpop.permute.xlu0 %627
          %630 = vset.pattern.permute.xlu0 1
          %631 = vperm.xlu0 %630, %v378
          %v632 = vpop.permute.xlu0 %631
          %634 = vset.pattern.permute.xlu0 1
          %635 = vperm.xlu0 %634, %v379
          %v636 = vpop.permute.xlu0 %635
          %638 = vset.pattern.permute.xlu0 1
          %639 = vperm.xlu0 %638, %v380
          %v640 = vpop.permute.xlu0 %639
          %642 = vset.pattern.permute.xlu0 1
          %643 = vperm.xlu0 %642, %v381
          %v644 = vpop.permute.xlu0 %643
          %646 = vset.pattern.permute.xlu0 1
          %647 = vperm.xlu0 %646, %v382
          %v648 = vpop.permute.xlu0 %647
          %650 = vset.pattern.permute.xlu0 1
          %651 = vperm.xlu0 %650, %v383
          %v652 = vpop.permute.xlu0 %651
          %654 = vset.pattern.permute.xlu0 1
          %655 = vperm.xlu0 %654, %v384
          %v656 = vpop.permute.xlu0 %655
          %658 = vset.pattern.permute.xlu0 1
          %659 = vperm.xlu0 %658, %v385
          %v660 = vpop.permute.xlu0 %659
          %662 = vset.pattern.permute.xlu0 1
          %663 = vperm.xlu0 %662, %v386
          %v664 = vpop.permute.xlu0 %663
          %v666 = vperm.slane %v370, 1
          %v667 = vperm.slane %v370, 5
          %v670 = vperm.slane %v666, 1
          %v671 = vperm.slane %v667, 1
          %v672 = vsub.f32 %v604, %v670
          %v673 = vsub.f32 %v604, %v671
          %v674 = vsub.f32 %v608, %v670
          %v675 = vsub.f32 %v608, %v671
          %v676 = vsub.f32 %v612, %v670
          %v677 = vsub.f32 %v612, %v671
          %v678 = vsub.f32 %v616, %v670
          %v679 = vsub.f32 %v616, %v671
          %v680 = vsub.f32 %v620, %v670
          %v681 = vsub.f32 %v620, %v671
          %v682 = vsub.f32 %v624, %v670
          %v683 = vsub.f32 %v624, %v671
          %v684 = vsub.f32 %v628, %v670
          %v685 = vsub.f32 %v628, %v671
          %v686 = vsub.f32 %v632, %v670
          %v687 = vsub.f32 %v632, %v671
          %v688 = vsub.f32 %v636, %v670
          %v689 = vsub.f32 %v636, %v671
          %v690 = vsub.f32 %v640, %v670
          %v691 = vsub.f32 %v640, %v671
          %v692 = vsub.f32 %v644, %v670
          %v693 = vsub.f32 %v644, %v671
          %v694 = vsub.f32 %v648, %v670
          %v695 = vsub.f32 %v648, %v671
          %v696 = vsub.f32 %v652, %v670
          %v697 = vsub.f32 %v652, %v671
          %v698 = vsub.f32 %v656, %v670
          %v699 = vsub.f32 %v656, %v671
          %v700 = vsub.f32 %v660, %v670
          %v701 = vsub.f32 %v660, %v671
          %v702 = vsub.f32 %v664, %v670
          %v703 = vsub.f32 %v664, %v671
          %v704 = vand.u32 2147483647, %v672
          %v705 = vand.u32 2147483647, %v673
          %v706 = vand.u32 2147483647, %v674
          %v707 = vand.u32 2147483647, %v675
          %v708 = vand.u32 2147483647, %v676
          %v709 = vand.u32 2147483647, %v677
          %v710 = vand.u32 2147483647, %v678
          %v711 = vand.u32 2147483647, %v679
          %v712 = vand.u32 2147483647, %v680
          %v713 = vand.u32 2147483647, %v681
          %v714 = vand.u32 2147483647, %v682
          %v715 = vand.u32 2147483647, %v683
          %v716 = vand.u32 2147483647, %v684
          %v717 = vand.u32 2147483647, %v685
          %v718 = vand.u32 2147483647, %v686
          %v719 = vand.u32 2147483647, %v687
          %v720 = vand.u32 2147483647, %v688
          %v721 = vand.u32 2147483647, %v689
          %v722 = vand.u32 2147483647, %v690
          %v723 = vand.u32 2147483647, %v691
          %v724 = vand.u32 2147483647, %v692
          %v725 = vand.u32 2147483647, %v693
          %v726 = vand.u32 2147483647, %v694
          %v727 = vand.u32 2147483647, %v695
          %v728 = vand.u32 2147483647, %v696
          %v729 = vand.u32 2147483647, %v697
          %v730 = vand.u32 2147483647, %v698
          %v731 = vand.u32 2147483647, %v699
          %v732 = vand.u32 2147483647, %v700
          %v733 = vand.u32 2147483647, %v701
          %v734 = vand.u32 2147483647, %v702
          %v735 = vand.u32 2147483647, %v703
          %v736 = vsub.f32 1.0, %v704
          %v737 = vsub.f32 1.0, %v705
          %v738 = vsub.f32 1.0, %v706
          %v739 = vsub.f32 1.0, %v707
          %v740 = vsub.f32 1.0, %v708
          %v741 = vsub.f32 1.0, %v709
          %v742 = vsub.f32 1.0, %v710
          %v743 = vsub.f32 1.0, %v711
          %v744 = vsub.f32 1.0, %v712
          %v745 = vsub.f32 1.0, %v713
          %v746 = vsub.f32 1.0, %v714
          %v747 = vsub.f32 1.0, %v715
          %v748 = vsub.f32 1.0, %v716
          %v749 = vsub.f32 1.0, %v717
          %v750 = vsub.f32 1.0, %v718
          %v751 = vsub.f32 1.0, %v719
          %v752 = vsub.f32 1.0, %v720
          %v753 = vsub.f32 1.0, %v721
          %v754 = vsub.f32 1.0, %v722
          %v755 = vsub.f32 1.0, %v723
          %v756 = vsub.f32 1.0, %v724
          %v757 = vsub.f32 1.0, %v725
          %v758 = vsub.f32 1.0, %v726
          %v759 = vsub.f32 1.0, %v727
          %v760 = vsub.f32 1.0, %v728
          %v761 = vsub.f32 1.0, %v729
          %v762 = vsub.f32 1.0, %v730
          %v763 = vsub.f32 1.0, %v731
          %v764 = vsub.f32 1.0, %v732
          %v765 = vsub.f32 1.0, %v733
          %v766 = vsub.f32 1.0, %v734
          %v767 = vsub.f32 1.0, %v735
          %v768 = vmax.f32 %v736, 0.0
          %v769 = vmax.f32 %v737, 0.0
          %v770 = vmax.f32 %v738, 0.0
          %v771 = vmax.f32 %v739, 0.0
          %v772 = vmax.f32 %v740, 0.0
          %v773 = vmax.f32 %v741, 0.0
          %v774 = vmax.f32 %v742, 0.0
          %v775 = vmax.f32 %v743, 0.0
          %v776 = vmax.f32 %v744, 0.0
          %v777 = vmax.f32 %v745, 0.0
          %v778 = vmax.f32 %v746, 0.0
          %v779 = vmax.f32 %v747, 0.0
          %v780 = vmax.f32 %v748, 0.0
          %v781 = vmax.f32 %v749, 0.0
          %v782 = vmax.f32 %v750, 0.0
          %v783 = vmax.f32 %v751, 0.0
          %v784 = vmax.f32 %v752, 0.0
          %v785 = vmax.f32 %v753, 0.0
          %v786 = vmax.f32 %v754, 0.0
          %v787 = vmax.f32 %v755, 0.0
          %v788 = vmax.f32 %v756, 0.0
          %v789 = vmax.f32 %v757, 0.0
          %v790 = vmax.f32 %v758, 0.0
          %v791 = vmax.f32 %v759, 0.0
          %v792 = vmax.f32 %v760, 0.0
          %v793 = vmax.f32 %v761, 0.0
          %v794 = vmax.f32 %v762, 0.0
          %v795 = vmax.f32 %v763, 0.0
          %v796 = vmax.f32 %v764, 0.0
          %v797 = vmax.f32 %v765, 0.0
          %v798 = vmax.f32 %v766, 0.0
          %v799 = vmax.f32 %v767, 0.0
          %800 = vset.pattern.permute.xlu0 2
          %801 = vperm.xlu0 %800, %v371
          %v802 = vpop.permute.xlu0 %801
          %804 = vset.pattern.permute.xlu0 2
          %805 = vperm.xlu0 %804, %v372
          %v806 = vpop.permute.xlu0 %805
          %808 = vset.pattern.permute.xlu0 2
          %809 = vperm.xlu0 %808, %v373
          %v810 = vpop.permute.xlu0 %809
          %812 = vset.pattern.permute.xlu0 2
          %813 = vperm.xlu0 %812, %v374
          %v814 = vpop.permute.xlu0 %813
          %816 = vset.pattern.permute.xlu0 2
          %817 = vperm.xlu0 %816, %v375
          %v818 = vpop.permute.xlu0 %817
          %820 = vset.pattern.permute.xlu0 2
          %821 = vperm.xlu0 %820, %v376
          %v822 = vpop.permute.xlu0 %821
          %824 = vset.pattern.permute.xlu0 2
          %825 = vperm.xlu0 %824, %v377
          %v826 = vpop.permute.xlu0 %825
          %828 = vset.pattern.permute.xlu0 2
          %829 = vperm.xlu0 %828, %v378
          %v830 = vpop.permute.xlu0 %829
          %832 = vset.pattern.permute.xlu0 2
          %833 = vperm.xlu0 %832, %v379
          %v834 = vpop.permute.xlu0 %833
          %836 = vset.pattern.permute.xlu0 2
          %837 = vperm.xlu0 %836, %v380
          %v838 = vpop.permute.xlu0 %837
          %840 = vset.pattern.permute.xlu0 2
          %841 = vperm.xlu0 %840, %v381
          %v842 = vpop.permute.xlu0 %841
          %844 = vset.pattern.permute.xlu0 2
          %845 = vperm.xlu0 %844, %v382
          %v846 = vpop.permute.xlu0 %845
          %848 = vset.pattern.permute.xlu0 2
          %849 = vperm.xlu0 %848, %v383
          %v850 = vpop.permute.xlu0 %849
          %852 = vset.pattern.permute.xlu0 2
          %853 = vperm.xlu0 %852, %v384
          %v854 = vpop.permute.xlu0 %853
          %856 = vset.pattern.permute.xlu0 2
          %857 = vperm.xlu0 %856, %v385
          %v858 = vpop.permute.xlu0 %857
          %860 = vset.pattern.permute.xlu0 2
          %861 = vperm.xlu0 %860, %v386
          %v862 = vpop.permute.xlu0 %861
          %v864 = vperm.slane %v370, 2
          %v865 = vperm.slane %v370, 6
          %v868 = vperm.slane %v864, 2
          %v869 = vperm.slane %v865, 2
          %v870 = vsub.f32 %v802, %v868
          %v871 = vsub.f32 %v802, %v869
          %v872 = vsub.f32 %v806, %v868
          %v873 = vsub.f32 %v806, %v869
          %v874 = vsub.f32 %v810, %v868
          %v875 = vsub.f32 %v810, %v869
          %v876 = vsub.f32 %v814, %v868
          %v877 = vsub.f32 %v814, %v869
          %v878 = vsub.f32 %v818, %v868
          %v879 = vsub.f32 %v818, %v869
          %v880 = vsub.f32 %v822, %v868
          %v881 = vsub.f32 %v822, %v869
          %v882 = vsub.f32 %v826, %v868
          %v883 = vsub.f32 %v826, %v869
          %v884 = vsub.f32 %v830, %v868
          %v885 = vsub.f32 %v830, %v869
          %v886 = vsub.f32 %v834, %v868
          %v887 = vsub.f32 %v834, %v869
          %v888 = vsub.f32 %v838, %v868
          %v889 = vsub.f32 %v838, %v869
          %v890 = vsub.f32 %v842, %v868
          %v891 = vsub.f32 %v842, %v869
          %v892 = vsub.f32 %v846, %v868
          %v893 = vsub.f32 %v846, %v869
          %v894 = vsub.f32 %v850, %v868
          %v895 = vsub.f32 %v850, %v869
          %v896 = vsub.f32 %v854, %v868
          %v897 = vsub.f32 %v854, %v869
          %v898 = vsub.f32 %v858, %v868
          %v899 = vsub.f32 %v858, %v869
          %v900 = vsub.f32 %v862, %v868
          %v901 = vsub.f32 %v862, %v869
          %v902 = vand.u32 2147483647, %v870
          %v903 = vand.u32 2147483647, %v871
          %v904 = vand.u32 2147483647, %v872
          %v905 = vand.u32 2147483647, %v873
          %v906 = vand.u32 2147483647, %v874
          %v907 = vand.u32 2147483647, %v875
          %v908 = vand.u32 2147483647, %v876
          %v909 = vand.u32 2147483647, %v877
          %v910 = vand.u32 2147483647, %v878
          %v911 = vand.u32 2147483647, %v879
          %v912 = vand.u32 2147483647, %v880
          %v913 = vand.u32 2147483647, %v881
          %v914 = vand.u32 2147483647, %v882
          %v915 = vand.u32 2147483647, %v883
          %v916 = vand.u32 2147483647, %v884
          %v917 = vand.u32 2147483647, %v885
          %v918 = vand.u32 2147483647, %v886
          %v919 = vand.u32 2147483647, %v887
          %v920 = vand.u32 2147483647, %v888
          %v921 = vand.u32 2147483647, %v889
          %v922 = vand.u32 2147483647, %v890
          %v923 = vand.u32 2147483647, %v891
          %v924 = vand.u32 2147483647, %v892
          %v925 = vand.u32 2147483647, %v893
          %v926 = vand.u32 2147483647, %v894
          %v927 = vand.u32 2147483647, %v895
          %v928 = vand.u32 2147483647, %v896
          %v929 = vand.u32 2147483647, %v897
          %v930 = vand.u32 2147483647, %v898
          %v931 = vand.u32 2147483647, %v899
          %v932 = vand.u32 2147483647, %v900
          %v933 = vand.u32 2147483647, %v901
          %v934 = vsub.f32 1.0, %v902
          %v935 = vsub.f32 1.0, %v903
          %v936 = vsub.f32 1.0, %v904
          %v937 = vsub.f32 1.0, %v905
          %v938 = vsub.f32 1.0, %v906
          %v939 = vsub.f32 1.0, %v907
          %v940 = vsub.f32 1.0, %v908
          %v941 = vsub.f32 1.0, %v909
          %v942 = vsub.f32 1.0, %v910
          %v943 = vsub.f32 1.0, %v911
          %v944 = vsub.f32 1.0, %v912
          %v945 = vsub.f32 1.0, %v913
          %v946 = vsub.f32 1.0, %v914
          %v947 = vsub.f32 1.0, %v915
          %v948 = vsub.f32 1.0, %v916
          %v949 = vsub.f32 1.0, %v917
          %v950 = vsub.f32 1.0, %v918
          %v951 = vsub.f32 1.0, %v919
          %v952 = vsub.f32 1.0, %v920
          %v953 = vsub.f32 1.0, %v921
          %v954 = vsub.f32 1.0, %v922
          %v955 = vsub.f32 1.0, %v923
          %v956 = vsub.f32 1.0, %v924
          %v957 = vsub.f32 1.0, %v925
          %v958 = vsub.f32 1.0, %v926
          %v959 = vsub.f32 1.0, %v927
          %v960 = vsub.f32 1.0, %v928
          %v961 = vsub.f32 1.0, %v929
          %v962 = vsub.f32 1.0, %v930
          %v963 = vsub.f32 1.0, %v931
          %v964 = vsub.f32 1.0, %v932
          %v965 = vsub.f32 1.0, %v933
          %v966 = vmax.f32 %v934, 0.0
          %v967 = vmax.f32 %v935, 0.0
          %v968 = vmax.f32 %v936, 0.0
          %v969 = vmax.f32 %v937, 0.0
          %v970 = vmax.f32 %v938, 0.0
          %v971 = vmax.f32 %v939, 0.0
          %v972 = vmax.f32 %v940, 0.0
          %v973 = vmax.f32 %v941, 0.0
          %v974 = vmax.f32 %v942, 0.0
          %v975 = vmax.f32 %v943, 0.0
          %v976 = vmax.f32 %v944, 0.0
          %v977 = vmax.f32 %v945, 0.0
          %v978 = vmax.f32 %v946, 0.0
          %v979 = vmax.f32 %v947, 0.0
          %v980 = vmax.f32 %v948, 0.0
          %v981 = vmax.f32 %v949, 0.0
          %v982 = vmax.f32 %v950, 0.0
          %v983 = vmax.f32 %v951, 0.0
          %v984 = vmax.f32 %v952, 0.0
          %v985 = vmax.f32 %v953, 0.0
          %v986 = vmax.f32 %v954, 0.0
          %v987 = vmax.f32 %v955, 0.0
          %v988 = vmax.f32 %v956, 0.0
          %v989 = vmax.f32 %v957, 0.0
          %v990 = vmax.f32 %v958, 0.0
          %v991 = vmax.f32 %v959, 0.0
          %v992 = vmax.f32 %v960, 0.0
          %v993 = vmax.f32 %v961, 0.0
          %v994 = vmax.f32 %v962, 0.0
          %v995 = vmax.f32 %v963, 0.0
          %v996 = vmax.f32 %v964, 0.0
          %v997 = vmax.f32 %v965, 0.0
          %v998 = vmul.f32 %v570, %v768
          %v999 = vmul.f32 %v571, %v769
          %v1000 = vmul.f32 %v572, %v770
          %v1001 = vmul.f32 %v573, %v771
          %v1002 = vmul.f32 %v574, %v772
          %v1003 = vmul.f32 %v575, %v773
          %v1004 = vmul.f32 %v576, %v774
          %v1005 = vmul.f32 %v577, %v775
          %v1006 = vmul.f32 %v578, %v776
          %v1007 = vmul.f32 %v579, %v777
          %v1008 = vmul.f32 %v580, %v778
          %v1009 = vmul.f32 %v581, %v779
          %v1010 = vmul.f32 %v582, %v780
          %v1011 = vmul.f32 %v583, %v781
          %v1012 = vmul.f32 %v584, %v782
          %v1013 = vmul.f32 %v585, %v783
          %v1014 = vmul.f32 %v586, %v784
          %v1015 = vmul.f32 %v587, %v785
          %v1016 = vmul.f32 %v588, %v786
          %v1017 = vmul.f32 %v589, %v787
          %v1018 = vmul.f32 %v590, %v788
          %v1019 = vmul.f32 %v591, %v789
          %v1020 = vmul.f32 %v592, %v790
          %v1021 = vmul.f32 %v593, %v791
          %v1022 = vmul.f32 %v594, %v792
          %v1023 = vmul.f32 %v595, %v793
          %v1024 = vmul.f32 %v596, %v794
          %v1025 = vmul.f32 %v597, %v795
          %v1026 = vmul.f32 %v598, %v796
          %v1027 = vmul.f32 %v599, %v797
          %v1028 = vmul.f32 %v600, %v798
          %v1029 = vmul.f32 %v601, %v799
          %v1030 = vmul.f32 %v998, %v966
          %v1031 = vmul.f32 %v999, %v967
          %v1032 = vmul.f32 %v1000, %v968
          %v1033 = vmul.f32 %v1001, %v969
          %v1034 = vmul.f32 %v1002, %v970
          %v1035 = vmul.f32 %v1003, %v971
          %v1036 = vmul.f32 %v1004, %v972
          %v1037 = vmul.f32 %v1005, %v973
          %v1038 = vmul.f32 %v1006, %v974
          %v1039 = vmul.f32 %v1007, %v975
          %v1040 = vmul.f32 %v1008, %v976
          %v1041 = vmul.f32 %v1009, %v977
          %v1042 = vmul.f32 %v1010, %v978
          %v1043 = vmul.f32 %v1011, %v979
          %v1044 = vmul.f32 %v1012, %v980
          %v1045 = vmul.f32 %v1013, %v981
          %v1046 = vmul.f32 %v1014, %v982
          %v1047 = vmul.f32 %v1015, %v983
          %v1048 = vmul.f32 %v1016, %v984
          %v1049 = vmul.f32 %v1017, %v985
          %v1050 = vmul.f32 %v1018, %v986
          %v1051 = vmul.f32 %v1019, %v987
          %v1052 = vmul.f32 %v1020, %v988
          %v1053 = vmul.f32 %v1021, %v989
          %v1054 = vmul.f32 %v1022, %v990
          %v1055 = vmul.f32 %v1023, %v991
          %v1056 = vmul.f32 %v1024, %v992
          %v1057 = vmul.f32 %v1025, %v993
          %v1058 = vmul.f32 %v1026, %v994
          %v1059 = vmul.f32 %v1027, %v995
          %v1060 = vmul.f32 %v1028, %v996
          %v1061 = vmul.f32 %v1029, %v997
          %s1062 = sld [smem:[#allocation4 + %s356]]
          %s1063 = sadd.s32 %s1062, %s40
          %p1064 = scmp.lt.s32.totalorder %s1063, 7
          %s1065 = scalar_select %p1064, %s1063, 7
          %s1066 = smul.u32 %s1065, 8
          %s1067 = scalar_lea.vmem %s319, %s1066
          %v1068 = vld [vmem:[%s1067] sm:$0xff]
          %v1069 = vld [vmem:[#allocation2] sm:$0xff]
          %v1070 = vld [vmem:[#allocation2 + $0x8] sm:$0xff]
          %v1071 = vand.u32 %v1060, 4294901760
          %1072 = vmatpush.msra.mxu0 %v1071
          %v1073 = vand.u32 %v1058, 4294901760
          %1074 = vmatpush.msra.mxu0 %v1073
          %v1075 = vand.u32 %v1056, 4294901760
          %1076 = vmatpush.msra.mxu0 %v1075
          %v1077 = vand.u32 %v1054, 4294901760
          %1078 = vmatpush.msra.mxu0 %v1077
          %v1079 = vand.u32 %v1052, 4294901760
          %1080 = vmatpush.msra.mxu0 %v1079
          %v1081 = vand.u32 %v1050, 4294901760
          %1082 = vmatpush.msra.mxu0 %v1081
          %v1083 = vand.u32 %v1048, 4294901760
          %1084 = vmatpush.msra.mxu0 %v1083
          %v1085 = vand.u32 %v1046, 4294901760
          %1086 = vmatpush.msra.mxu0 %v1085
          %v1087 = vand.u32 %v1044, 4294901760
          %1088 = vmatpush.msra.mxu0 %v1087
          %v1089 = vand.u32 %v1042, 4294901760
          %1090 = vmatpush.msra.mxu0 %v1089
          %v1091 = vand.u32 %v1040, 4294901760
          %1092 = vmatpush.msra.mxu0 %v1091
          %v1093 = vand.u32 %v1038, 4294901760
          %1094 = vmatpush.msra.mxu0 %v1093
          %v1095 = vand.u32 %v1036, 4294901760
          %1096 = vmatpush.msra.mxu0 %v1095
          %v1097 = vand.u32 %v1034, 4294901760
          %1098 = vmatpush.msra.mxu0 %v1097
          %v1099 = vand.u32 %v1032, 4294901760
          %1100 = vmatpush.msra.mxu0 %v1099
          %v1101 = vand.u32 %v1030, 4294901760
          %1102 = vmatpush.msra.mxu0 %v1101
          %v1103 = vand.u32 %v1068, 4294901760
          %v1104 = vsub.f32 %v1068, %v1103
          %v1105 = vand.u32 %v1104, 4294901760
          %v1106 = vsub.f32 %v1104, %v1105
          %v1107 = vand.u32 %v1106, 4294901760
          %1108 = vmatmul.f32.gmra.mxu0 %v1107
          %v1109 = vpop.f32.mrf.mxu0
          %v1110 = vadd.f32 0.0, %v1109
          %1111 = vdwg.mxu0
          %v1112 = vand.u32 %v1060, 4294901760
          %v1113 = vsub.f32 %v1060, %v1112
          %v1114 = vand.u32 %v1113, 4294901760
          %v1115 = vsub.f32 %v1113, %v1114
          %v1116 = vand.u32 %v1115, 4294901760
          %1117 = vmatpush.msra.mxu0 %v1116
          %v1118 = vand.u32 %v1058, 4294901760
          %v1119 = vsub.f32 %v1058, %v1118
          %v1120 = vand.u32 %v1119, 4294901760
          %v1121 = vsub.f32 %v1119, %v1120
          %v1122 = vand.u32 %v1121, 4294901760
          %1123 = vmatpush.msra.mxu0 %v1122
          %v1124 = vand.u32 %v1056, 4294901760
          %v1125 = vsub.f32 %v1056, %v1124
          %v1126 = vand.u32 %v1125, 4294901760
          %v1127 = vsub.f32 %v1125, %v1126
          %v1128 = vand.u32 %v1127, 4294901760
          %1129 = vmatpush.msra.mxu0 %v1128
          %v1130 = vand.u32 %v1054, 4294901760
          %v1131 = vsub.f32 %v1054, %v1130
          %v1132 = vand.u32 %v1131, 4294901760
          %v1133 = vsub.f32 %v1131, %v1132
          %v1134 = vand.u32 %v1133, 4294901760
          %1135 = vmatpush.msra.mxu0 %v1134
          %v1136 = vand.u32 %v1052, 4294901760
          %v1137 = vsub.f32 %v1052, %v1136
          %v1138 = vand.u32 %v1137, 4294901760
          %v1139 = vsub.f32 %v1137, %v1138
          %v1140 = vand.u32 %v1139, 4294901760
          %1141 = vmatpush.msra.mxu0 %v1140
          %v1142 = vand.u32 %v1050, 4294901760
          %v1143 = vsub.f32 %v1050, %v1142
          %v1144 = vand.u32 %v1143, 4294901760
          %v1145 = vsub.f32 %v1143, %v1144
          %v1146 = vand.u32 %v1145, 4294901760
          %1147 = vmatpush.msra.mxu0 %v1146
          %v1148 = vand.u32 %v1048, 4294901760
          %v1149 = vsub.f32 %v1048, %v1148
          %v1150 = vand.u32 %v1149, 4294901760
          %v1151 = vsub.f32 %v1149, %v1150
          %v1152 = vand.u32 %v1151, 4294901760
          %1153 = vmatpush.msra.mxu0 %v1152
          %v1154 = vand.u32 %v1046, 4294901760
          %v1155 = vsub.f32 %v1046, %v1154
          %v1156 = vand.u32 %v1155, 4294901760
          %v1157 = vsub.f32 %v1155, %v1156
          %v1158 = vand.u32 %v1157, 4294901760
          %1159 = vmatpush.msra.mxu0 %v1158
          %v1160 = vand.u32 %v1044, 4294901760
          %v1161 = vsub.f32 %v1044, %v1160
          %v1162 = vand.u32 %v1161, 4294901760
          %v1163 = vsub.f32 %v1161, %v1162
          %v1164 = vand.u32 %v1163, 4294901760
          %1165 = vmatpush.msra.mxu0 %v1164
          %v1166 = vand.u32 %v1042, 4294901760
          %v1167 = vsub.f32 %v1042, %v1166
          %v1168 = vand.u32 %v1167, 4294901760
          %v1169 = vsub.f32 %v1167, %v1168
          %v1170 = vand.u32 %v1169, 4294901760
          %1171 = vmatpush.msra.mxu0 %v1170
          %v1172 = vand.u32 %v1040, 4294901760
          %v1173 = vsub.f32 %v1040, %v1172
          %v1174 = vand.u32 %v1173, 4294901760
          %v1175 = vsub.f32 %v1173, %v1174
          %v1176 = vand.u32 %v1175, 4294901760
          %1177 = vmatpush.msra.mxu0 %v1176
          %v1178 = vand.u32 %v1038, 4294901760
          %v1179 = vsub.f32 %v1038, %v1178
          %v1180 = vand.u32 %v1179, 4294901760
          %v1181 = vsub.f32 %v1179, %v1180
          %v1182 = vand.u32 %v1181, 4294901760
          %1183 = vmatpush.msra.mxu0 %v1182
          %v1184 = vand.u32 %v1036, 4294901760
          %v1185 = vsub.f32 %v1036, %v1184
          %v1186 = vand.u32 %v1185, 4294901760
          %v1187 = vsub.f32 %v1185, %v1186
          %v1188 = vand.u32 %v1187, 4294901760
          %1189 = vmatpush.msra.mxu0 %v1188
          %v1190 = vand.u32 %v1034, 4294901760
          %v1191 = vsub.f32 %v1034, %v1190
          %v1192 = vand.u32 %v1191, 4294901760
          %v1193 = vsub.f32 %v1191, %v1192
          %v1194 = vand.u32 %v1193, 4294901760
          %1195 = vmatpush.msra.mxu0 %v1194
          %v1196 = vand.u32 %v1032, 4294901760
          %v1197 = vsub.f32 %v1032, %v1196
          %v1198 = vand.u32 %v1197, 4294901760
          %v1199 = vsub.f32 %v1197, %v1198
          %v1200 = vand.u32 %v1199, 4294901760
          %1201 = vmatpush.msra.mxu0 %v1200
          %v1202 = vand.u32 %v1030, 4294901760
          %v1203 = vsub.f32 %v1030, %v1202
          %v1204 = vand.u32 %v1203, 4294901760
          %v1205 = vsub.f32 %v1203, %v1204
          %v1206 = vand.u32 %v1205, 4294901760
          %1207 = vmatpush.msra.mxu0 %v1206
          %v1208 = vand.u32 %v1068, 4294901760
          %1209 = vmatmul.f32.gmra.mxu0 %v1208
          %v1210 = vpop.f32.mrf.mxu0
          %v1211 = vadd.f32 %v1110, %v1210
          %1212 = vdwg.mxu0
          %v1213 = vand.u32 %v1060, 4294901760
          %v1214 = vsub.f32 %v1060, %v1213
          %1215 = vmatpush.msra.mxu0 %v1214
          %v1216 = vand.u32 %v1058, 4294901760
          %v1217 = vsub.f32 %v1058, %v1216
          %1218 = vmatpush.msra.mxu0 %v1217
          %v1219 = vand.u32 %v1056, 4294901760
          %v1220 = vsub.f32 %v1056, %v1219
          %1221 = vmatpush.msra.mxu0 %v1220
          %v1222 = vand.u32 %v1054, 4294901760
          %v1223 = vsub.f32 %v1054, %v1222
          %1224 = vmatpush.msra.mxu0 %v1223
          %v1225 = vand.u32 %v1052, 4294901760
          %v1226 = vsub.f32 %v1052, %v1225
          %1227 = vmatpush.msra.mxu0 %v1226
          %v1228 = vand.u32 %v1050, 4294901760
          %v1229 = vsub.f32 %v1050, %v1228
          %1230 = vmatpush.msra.mxu0 %v1229
          %v1231 = vand.u32 %v1048, 4294901760
          %v1232 = vsub.f32 %v1048, %v1231
          %1233 = vmatpush.msra.mxu0 %v1232
          %v1234 = vand.u32 %v1046, 4294901760
          %v1235 = vsub.f32 %v1046, %v1234
          %1236 = vmatpush.msra.mxu0 %v1235
          %v1237 = vand.u32 %v1044, 4294901760
          %v1238 = vsub.f32 %v1044, %v1237
          %1239 = vmatpush.msra.mxu0 %v1238
          %v1240 = vand.u32 %v1042, 4294901760
          %v1241 = vsub.f32 %v1042, %v1240
          %1242 = vmatpush.msra.mxu0 %v1241
          %v1243 = vand.u32 %v1040, 4294901760
          %v1244 = vsub.f32 %v1040, %v1243
          %1245 = vmatpush.msra.mxu0 %v1244
          %v1246 = vand.u32 %v1038, 4294901760
          %v1247 = vsub.f32 %v1038, %v1246
          %1248 = vmatpush.msra.mxu0 %v1247
          %v1249 = vand.u32 %v1036, 4294901760
          %v1250 = vsub.f32 %v1036, %v1249
          %1251 = vmatpush.msra.mxu0 %v1250
          %v1252 = vand.u32 %v1034, 4294901760
          %v1253 = vsub.f32 %v1034, %v1252
          %1254 = vmatpush.msra.mxu0 %v1253
          %v1255 = vand.u32 %v1032, 4294901760
          %v1256 = vsub.f32 %v1032, %v1255
          %1257 = vmatpush.msra.mxu0 %v1256
          %v1258 = vand.u32 %v1030, 4294901760
          %v1259 = vsub.f32 %v1030, %v1258
          %1260 = vmatpush.msra.mxu0 %v1259
          %v1261 = vand.u32 %v1068, 4294901760
          %v1262 = vsub.f32 %v1068, %v1261
          %1263 = vmatmul.f32.gmra.mxu0 %v1262
          %v1264 = vpop.f32.mrf.mxu0
          %v1265 = vadd.f32 %v1211, %v1264
          %1266 = vdwg.mxu0
          %v1267 = vand.u32 %v1060, 4294901760
          %1268 = vmatpush.msra.mxu0 %v1267
          %v1269 = vand.u32 %v1058, 4294901760
          %1270 = vmatpush.msra.mxu0 %v1269
          %v1271 = vand.u32 %v1056, 4294901760
          %1272 = vmatpush.msra.mxu0 %v1271
          %v1273 = vand.u32 %v1054, 4294901760
          %1274 = vmatpush.msra.mxu0 %v1273
          %v1275 = vand.u32 %v1052, 4294901760
          %1276 = vmatpush.msra.mxu0 %v1275
          %v1277 = vand.u32 %v1050, 4294901760
          %1278 = vmatpush.msra.mxu0 %v1277
          %v1279 = vand.u32 %v1048, 4294901760
          %1280 = vmatpush.msra.mxu0 %v1279
          %v1281 = vand.u32 %v1046, 4294901760
          %1282 = vmatpush.msra.mxu0 %v1281
          %v1283 = vand.u32 %v1044, 4294901760
          %1284 = vmatpush.msra.mxu0 %v1283
          %v1285 = vand.u32 %v1042, 4294901760
          %1286 = vmatpush.msra.mxu0 %v1285
          %v1287 = vand.u32 %v1040, 4294901760
          %1288 = vmatpush.msra.mxu0 %v1287
          %v1289 = vand.u32 %v1038, 4294901760
          %1290 = vmatpush.msra.mxu0 %v1289
          %v1291 = vand.u32 %v1036, 4294901760
          %1292 = vmatpush.msra.mxu0 %v1291
          %v1293 = vand.u32 %v1034, 4294901760
          %1294 = vmatpush.msra.mxu0 %v1293
          %v1295 = vand.u32 %v1032, 4294901760
          %1296 = vmatpush.msra.mxu0 %v1295
          %v1297 = vand.u32 %v1030, 4294901760
          %1298 = vmatpush.msra.mxu0 %v1297
          %v1299 = vand.u32 %v1068, 4294901760
          %v1300 = vsub.f32 %v1068, %v1299
          %v1301 = vand.u32 %v1300, 4294901760
          %1302 = vmatmul.f32.gmra.mxu0 %v1301
          %v1303 = vpop.f32.mrf.mxu0
          %v1304 = vadd.f32 %v1265, %v1303
          %1305 = vdwg.mxu0
          %v1306 = vand.u32 %v1060, 4294901760
          %v1307 = vsub.f32 %v1060, %v1306
          %v1308 = vand.u32 %v1307, 4294901760
          %1309 = vmatpush.msra.mxu0 %v1308
          %v1310 = vand.u32 %v1058, 4294901760
          %v1311 = vsub.f32 %v1058, %v1310
          %v1312 = vand.u32 %v1311, 4294901760
          %1313 = vmatpush.msra.mxu0 %v1312
          %v1314 = vand.u32 %v1056, 4294901760
          %v1315 = vsub.f32 %v1056, %v1314
          %v1316 = vand.u32 %v1315, 4294901760
          %1317 = vmatpush.msra.mxu0 %v1316
          %v1318 = vand.u32 %v1054, 4294901760
          %v1319 = vsub.f32 %v1054, %v1318
          %v1320 = vand.u32 %v1319, 4294901760
          %1321 = vmatpush.msra.mxu0 %v1320
          %v1322 = vand.u32 %v1052, 4294901760
          %v1323 = vsub.f32 %v1052, %v1322
          %v1324 = vand.u32 %v1323, 4294901760
          %1325 = vmatpush.msra.mxu0 %v1324
          %v1326 = vand.u32 %v1050, 4294901760
          %v1327 = vsub.f32 %v1050, %v1326
          %v1328 = vand.u32 %v1327, 4294901760
          %1329 = vmatpush.msra.mxu0 %v1328
          %v1330 = vand.u32 %v1048, 4294901760
          %v1331 = vsub.f32 %v1048, %v1330
          %v1332 = vand.u32 %v1331, 4294901760
          %1333 = vmatpush.msra.mxu0 %v1332
          %v1334 = vand.u32 %v1046, 4294901760
          %v1335 = vsub.f32 %v1046, %v1334
          %v1336 = vand.u32 %v1335, 4294901760
          %1337 = vmatpush.msra.mxu0 %v1336
          %v1338 = vand.u32 %v1044, 4294901760
          %v1339 = vsub.f32 %v1044, %v1338
          %v1340 = vand.u32 %v1339, 4294901760
          %1341 = vmatpush.msra.mxu0 %v1340
          %v1342 = vand.u32 %v1042, 4294901760
          %v1343 = vsub.f32 %v1042, %v1342
          %v1344 = vand.u32 %v1343, 4294901760
          %1345 = vmatpush.msra.mxu0 %v1344
          %v1346 = vand.u32 %v1040, 4294901760
          %v1347 = vsub.f32 %v1040, %v1346
          %v1348 = vand.u32 %v1347, 4294901760
          %1349 = vmatpush.msra.mxu0 %v1348
          %v1350 = vand.u32 %v1038, 4294901760
          %v1351 = vsub.f32 %v1038, %v1350
          %v1352 = vand.u32 %v1351, 4294901760
          %1353 = vmatpush.msra.mxu0 %v1352
          %v1354 = vand.u32 %v1036, 4294901760
          %v1355 = vsub.f32 %v1036, %v1354
          %v1356 = vand.u32 %v1355, 4294901760
          %1357 = vmatpush.msra.mxu0 %v1356
          %v1358 = vand.u32 %v1034, 4294901760
          %v1359 = vsub.f32 %v1034, %v1358
          %v1360 = vand.u32 %v1359, 4294901760
          %1361 = vmatpush.msra.mxu0 %v1360
          %v1362 = vand.u32 %v1032, 4294901760
          %v1363 = vsub.f32 %v1032, %v1362
          %v1364 = vand.u32 %v1363, 4294901760
          %1365 = vmatpush.msra.mxu0 %v1364
          %v1366 = vand.u32 %v1030, 4294901760
          %v1367 = vsub.f32 %v1030, %v1366
          %v1368 = vand.u32 %v1367, 4294901760
          %1369 = vmatpush.msra.mxu0 %v1368
          %v1370 = vand.u32 %v1068, 4294901760
          %1371 = vmatmul.f32.gmra.mxu0 %v1370
          %v1372 = vpop.f32.mrf.mxu0
          %v1373 = vadd.f32 %v1304, %v1372
          %1374 = vdwg.mxu0
          %v1375 = vand.u32 %v1060, 4294901760
          %1376 = vmatpush.msra.mxu0 %v1375
          %v1377 = vand.u32 %v1058, 4294901760
          %1378 = vmatpush.msra.mxu0 %v1377
          %v1379 = vand.u32 %v1056, 4294901760
          %1380 = vmatpush.msra.mxu0 %v1379
          %v1381 = vand.u32 %v1054, 4294901760
          %1382 = vmatpush.msra.mxu0 %v1381
          %v1383 = vand.u32 %v1052, 4294901760
          %1384 = vmatpush.msra.mxu0 %v1383
          %v1385 = vand.u32 %v1050, 4294901760
          %1386 = vmatpush.msra.mxu0 %v1385
          %v1387 = vand.u32 %v1048, 4294901760
          %1388 = vmatpush.msra.mxu0 %v1387
          %v1389 = vand.u32 %v1046, 4294901760
          %1390 = vmatpush.msra.mxu0 %v1389
          %v1391 = vand.u32 %v1044, 4294901760
          %1392 = vmatpush.msra.mxu0 %v1391
          %v1393 = vand.u32 %v1042, 4294901760
          %1394 = vmatpush.msra.mxu0 %v1393
          %v1395 = vand.u32 %v1040, 4294901760
          %1396 = vmatpush.msra.mxu0 %v1395
          %v1397 = vand.u32 %v1038, 4294901760
          %1398 = vmatpush.msra.mxu0 %v1397
          %v1399 = vand.u32 %v1036, 4294901760
          %1400 = vmatpush.msra.mxu0 %v1399
          %v1401 = vand.u32 %v1034, 4294901760
          %1402 = vmatpush.msra.mxu0 %v1401
          %v1403 = vand.u32 %v1032, 4294901760
          %1404 = vmatpush.msra.mxu0 %v1403
          %v1405 = vand.u32 %v1030, 4294901760
          %1406 = vmatpush.msra.mxu0 %v1405
          %v1407 = vand.u32 %v1068, 4294901760
          %1408 = vmatmul.f32.gmra.mxu0 %v1407
          %v1409 = vpop.f32.mrf.mxu0
          %v1410 = vadd.f32 %v1373, %v1409
          %1411 = vdwg.mxu0
          %v1412 = vand.u32 %v1061, 4294901760
          %1413 = vmatpush.msra.mxu0 %v1412
          %v1414 = vand.u32 %v1059, 4294901760
          %1415 = vmatpush.msra.mxu0 %v1414
          %v1416 = vand.u32 %v1057, 4294901760
          %1417 = vmatpush.msra.mxu0 %v1416
          %v1418 = vand.u32 %v1055, 4294901760
          %1419 = vmatpush.msra.mxu0 %v1418
          %v1420 = vand.u32 %v1053, 4294901760
          %1421 = vmatpush.msra.mxu0 %v1420
          %v1422 = vand.u32 %v1051, 4294901760
          %1423 = vmatpush.msra.mxu0 %v1422
          %v1424 = vand.u32 %v1049, 4294901760
          %1425 = vmatpush.msra.mxu0 %v1424
          %v1426 = vand.u32 %v1047, 4294901760
          %1427 = vmatpush.msra.mxu0 %v1426
          %v1428 = vand.u32 %v1045, 4294901760
          %1429 = vmatpush.msra.mxu0 %v1428
          %v1430 = vand.u32 %v1043, 4294901760
          %1431 = vmatpush.msra.mxu0 %v1430
          %v1432 = vand.u32 %v1041, 4294901760
          %1433 = vmatpush.msra.mxu0 %v1432
          %v1434 = vand.u32 %v1039, 4294901760
          %1435 = vmatpush.msra.mxu0 %v1434
          %v1436 = vand.u32 %v1037, 4294901760
          %1437 = vmatpush.msra.mxu0 %v1436
          %v1438 = vand.u32 %v1035, 4294901760
          %1439 = vmatpush.msra.mxu0 %v1438
          %v1440 = vand.u32 %v1033, 4294901760
          %1441 = vmatpush.msra.mxu0 %v1440
          %v1442 = vand.u32 %v1031, 4294901760
          %1443 = vmatpush.msra.mxu0 %v1442
          %v1444 = vand.u32 %v1068, 4294901760
          %v1445 = vsub.f32 %v1068, %v1444
          %v1446 = vand.u32 %v1445, 4294901760
          %v1447 = vsub.f32 %v1445, %v1446
          %v1448 = vand.u32 %v1447, 4294901760
          %1449 = vmatmul.f32.gmra.mxu0 %v1448
          %v1450 = vpop.f32.mrf.mxu0
          %v1451 = vadd.f32 0.0, %v1450
          %1452 = vdwg.mxu0
          %v1453 = vand.u32 %v1061, 4294901760
          %v1454 = vsub.f32 %v1061, %v1453
          %v1455 = vand.u32 %v1454, 4294901760
          %v1456 = vsub.f32 %v1454, %v1455
          %v1457 = vand.u32 %v1456, 4294901760
          %1458 = vmatpush.msra.mxu0 %v1457
          %v1459 = vand.u32 %v1059, 4294901760
          %v1460 = vsub.f32 %v1059, %v1459
          %v1461 = vand.u32 %v1460, 4294901760
          %v1462 = vsub.f32 %v1460, %v1461
          %v1463 = vand.u32 %v1462, 4294901760
          %1464 = vmatpush.msra.mxu0 %v1463
          %v1465 = vand.u32 %v1057, 4294901760
          %v1466 = vsub.f32 %v1057, %v1465
          %v1467 = vand.u32 %v1466, 4294901760
          %v1468 = vsub.f32 %v1466, %v1467
          %v1469 = vand.u32 %v1468, 4294901760
          %1470 = vmatpush.msra.mxu0 %v1469
          %v1471 = vand.u32 %v1055, 4294901760
          %v1472 = vsub.f32 %v1055, %v1471
          %v1473 = vand.u32 %v1472, 4294901760
          %v1474 = vsub.f32 %v1472, %v1473
          %v1475 = vand.u32 %v1474, 4294901760
          %1476 = vmatpush.msra.mxu0 %v1475
          %v1477 = vand.u32 %v1053, 4294901760
          %v1478 = vsub.f32 %v1053, %v1477
          %v1479 = vand.u32 %v1478, 4294901760
          %v1480 = vsub.f32 %v1478, %v1479
          %v1481 = vand.u32 %v1480, 4294901760
          %1482 = vmatpush.msra.mxu0 %v1481
          %v1483 = vand.u32 %v1051, 4294901760
          %v1484 = vsub.f32 %v1051, %v1483
          %v1485 = vand.u32 %v1484, 4294901760
          %v1486 = vsub.f32 %v1484, %v1485
          %v1487 = vand.u32 %v1486, 4294901760
          %1488 = vmatpush.msra.mxu0 %v1487
          %v1489 = vand.u32 %v1049, 4294901760
          %v1490 = vsub.f32 %v1049, %v1489
          %v1491 = vand.u32 %v1490, 4294901760
          %v1492 = vsub.f32 %v1490, %v1491
          %v1493 = vand.u32 %v1492, 4294901760
          %1494 = vmatpush.msra.mxu0 %v1493
          %v1495 = vand.u32 %v1047, 4294901760
          %v1496 = vsub.f32 %v1047, %v1495
          %v1497 = vand.u32 %v1496, 4294901760
          %v1498 = vsub.f32 %v1496, %v1497
          %v1499 = vand.u32 %v1498, 4294901760
          %1500 = vmatpush.msra.mxu0 %v1499
          %v1501 = vand.u32 %v1045, 4294901760
          %v1502 = vsub.f32 %v1045, %v1501
          %v1503 = vand.u32 %v1502, 4294901760
          %v1504 = vsub.f32 %v1502, %v1503
          %v1505 = vand.u32 %v1504, 4294901760
          %1506 = vmatpush.msra.mxu0 %v1505
          %v1507 = vand.u32 %v1043, 4294901760
          %v1508 = vsub.f32 %v1043, %v1507
          %v1509 = vand.u32 %v1508, 4294901760
          %v1510 = vsub.f32 %v1508, %v1509
          %v1511 = vand.u32 %v1510, 4294901760
          %1512 = vmatpush.msra.mxu0 %v1511
          %v1513 = vand.u32 %v1041, 4294901760
          %v1514 = vsub.f32 %v1041, %v1513
          %v1515 = vand.u32 %v1514, 4294901760
          %v1516 = vsub.f32 %v1514, %v1515
          %v1517 = vand.u32 %v1516, 4294901760
          %1518 = vmatpush.msra.mxu0 %v1517
          %v1519 = vand.u32 %v1039, 4294901760
          %v1520 = vsub.f32 %v1039, %v1519
          %v1521 = vand.u32 %v1520, 4294901760
          %v1522 = vsub.f32 %v1520, %v1521
          %v1523 = vand.u32 %v1522, 4294901760
          %1524 = vmatpush.msra.mxu0 %v1523
          %v1525 = vand.u32 %v1037, 4294901760
          %v1526 = vsub.f32 %v1037, %v1525
          %v1527 = vand.u32 %v1526, 4294901760
          %v1528 = vsub.f32 %v1526, %v1527
          %v1529 = vand.u32 %v1528, 4294901760
          %1530 = vmatpush.msra.mxu0 %v1529
          %v1531 = vand.u32 %v1035, 4294901760
          %v1532 = vsub.f32 %v1035, %v1531
          %v1533 = vand.u32 %v1532, 4294901760
          %v1534 = vsub.f32 %v1532, %v1533
          %v1535 = vand.u32 %v1534, 4294901760
          %1536 = vmatpush.msra.mxu0 %v1535
          %v1537 = vand.u32 %v1033, 4294901760
          %v1538 = vsub.f32 %v1033, %v1537
          %v1539 = vand.u32 %v1538, 4294901760
          %v1540 = vsub.f32 %v1538, %v1539
          %v1541 = vand.u32 %v1540, 4294901760
          %1542 = vmatpush.msra.mxu0 %v1541
          %v1543 = vand.u32 %v1031, 4294901760
          %v1544 = vsub.f32 %v1031, %v1543
          %v1545 = vand.u32 %v1544, 4294901760
          %v1546 = vsub.f32 %v1544, %v1545
          %v1547 = vand.u32 %v1546, 4294901760
          %1548 = vmatpush.msra.mxu0 %v1547
          %v1549 = vand.u32 %v1068, 4294901760
          %1550 = vmatmul.f32.gmra.mxu0 %v1549
          %v1551 = vpop.f32.mrf.mxu0
          %v1552 = vadd.f32 %v1451, %v1551
          %1553 = vdwg.mxu0
          %v1554 = vand.u32 %v1061, 4294901760
          %v1555 = vsub.f32 %v1061, %v1554
          %1556 = vmatpush.msra.mxu0 %v1555
          %v1557 = vand.u32 %v1059, 4294901760
          %v1558 = vsub.f32 %v1059, %v1557
          %1559 = vmatpush.msra.mxu0 %v1558
          %v1560 = vand.u32 %v1057, 4294901760
          %v1561 = vsub.f32 %v1057, %v1560
          %1562 = vmatpush.msra.mxu0 %v1561
          %v1563 = vand.u32 %v1055, 4294901760
          %v1564 = vsub.f32 %v1055, %v1563
          %1565 = vmatpush.msra.mxu0 %v1564
          %v1566 = vand.u32 %v1053, 4294901760
          %v1567 = vsub.f32 %v1053, %v1566
          %1568 = vmatpush.msra.mxu0 %v1567
          %v1569 = vand.u32 %v1051, 4294901760
          %v1570 = vsub.f32 %v1051, %v1569
          %1571 = vmatpush.msra.mxu0 %v1570
          %v1572 = vand.u32 %v1049, 4294901760
          %v1573 = vsub.f32 %v1049, %v1572
          %1574 = vmatpush.msra.mxu0 %v1573
          %v1575 = vand.u32 %v1047, 4294901760
          %v1576 = vsub.f32 %v1047, %v1575
          %1577 = vmatpush.msra.mxu0 %v1576
          %v1578 = vand.u32 %v1045, 4294901760
          %v1579 = vsub.f32 %v1045, %v1578
          %1580 = vmatpush.msra.mxu0 %v1579
          %v1581 = vand.u32 %v1043, 4294901760
          %v1582 = vsub.f32 %v1043, %v1581
          %1583 = vmatpush.msra.mxu0 %v1582
          %v1584 = vand.u32 %v1041, 4294901760
          %v1585 = vsub.f32 %v1041, %v1584
          %1586 = vmatpush.msra.mxu0 %v1585
          %v1587 = vand.u32 %v1039, 4294901760
          %v1588 = vsub.f32 %v1039, %v1587
          %1589 = vmatpush.msra.mxu0 %v1588
          %v1590 = vand.u32 %v1037, 4294901760
          %v1591 = vsub.f32 %v1037, %v1590
          %1592 = vmatpush.msra.mxu0 %v1591
          %v1593 = vand.u32 %v1035, 4294901760
          %v1594 = vsub.f32 %v1035, %v1593
          %1595 = vmatpush.msra.mxu0 %v1594
          %v1596 = vand.u32 %v1033, 4294901760
          %v1597 = vsub.f32 %v1033, %v1596
          %1598 = vmatpush.msra.mxu0 %v1597
          %v1599 = vand.u32 %v1031, 4294901760
          %v1600 = vsub.f32 %v1031, %v1599
          %1601 = vmatpush.msra.mxu0 %v1600
          %v1602 = vand.u32 %v1068, 4294901760
          %v1603 = vsub.f32 %v1068, %v1602
          %1604 = vmatmul.f32.gmra.mxu0 %v1603
          %v1605 = vpop.f32.mrf.mxu0
          %v1606 = vadd.f32 %v1552, %v1605
          %1607 = vdwg.mxu0
          %v1608 = vand.u32 %v1061, 4294901760
          %1609 = vmatpush.msra.mxu0 %v1608
          %v1610 = vand.u32 %v1059, 4294901760
          %1611 = vmatpush.msra.mxu0 %v1610
          %v1612 = vand.u32 %v1057, 4294901760
          %1613 = vmatpush.msra.mxu0 %v1612
          %v1614 = vand.u32 %v1055, 4294901760
          %1615 = vmatpush.msra.mxu0 %v1614
          %v1616 = vand.u32 %v1053, 4294901760
          %1617 = vmatpush.msra.mxu0 %v1616
          %v1618 = vand.u32 %v1051, 4294901760
          %1619 = vmatpush.msra.mxu0 %v1618
          %v1620 = vand.u32 %v1049, 4294901760
          %1621 = vmatpush.msra.mxu0 %v1620
          %v1622 = vand.u32 %v1047, 4294901760
          %1623 = vmatpush.msra.mxu0 %v1622
          %v1624 = vand.u32 %v1045, 4294901760
          %1625 = vmatpush.msra.mxu0 %v1624
          %v1626 = vand.u32 %v1043, 4294901760
          %1627 = vmatpush.msra.mxu0 %v1626
          %v1628 = vand.u32 %v1041, 4294901760
          %1629 = vmatpush.msra.mxu0 %v1628
          %v1630 = vand.u32 %v1039, 4294901760
          %1631 = vmatpush.msra.mxu0 %v1630
          %v1632 = vand.u32 %v1037, 4294901760
          %1633 = vmatpush.msra.mxu0 %v1632
          %v1634 = vand.u32 %v1035, 4294901760
          %1635 = vmatpush.msra.mxu0 %v1634
          %v1636 = vand.u32 %v1033, 4294901760
          %1637 = vmatpush.msra.mxu0 %v1636
          %v1638 = vand.u32 %v1031, 4294901760
          %1639 = vmatpush.msra.mxu0 %v1638
          %v1640 = vand.u32 %v1068, 4294901760
          %v1641 = vsub.f32 %v1068, %v1640
          %v1642 = vand.u32 %v1641, 4294901760
          %1643 = vmatmul.f32.gmra.mxu0 %v1642
          %v1644 = vpop.f32.mrf.mxu0
          %v1645 = vadd.f32 %v1606, %v1644
          %1646 = vdwg.mxu0
          %v1647 = vand.u32 %v1061, 4294901760
          %v1648 = vsub.f32 %v1061, %v1647
          %v1649 = vand.u32 %v1648, 4294901760
          %1650 = vmatpush.msra.mxu0 %v1649
          %v1651 = vand.u32 %v1059, 4294901760
          %v1652 = vsub.f32 %v1059, %v1651
          %v1653 = vand.u32 %v1652, 4294901760
          %1654 = vmatpush.msra.mxu0 %v1653
          %v1655 = vand.u32 %v1057, 4294901760
          %v1656 = vsub.f32 %v1057, %v1655
          %v1657 = vand.u32 %v1656, 4294901760
          %1658 = vmatpush.msra.mxu0 %v1657
          %v1659 = vand.u32 %v1055, 4294901760
          %v1660 = vsub.f32 %v1055, %v1659
          %v1661 = vand.u32 %v1660, 4294901760
          %1662 = vmatpush.msra.mxu0 %v1661
          %v1663 = vand.u32 %v1053, 4294901760
          %v1664 = vsub.f32 %v1053, %v1663
          %v1665 = vand.u32 %v1664, 4294901760
          %1666 = vmatpush.msra.mxu0 %v1665
          %v1667 = vand.u32 %v1051, 4294901760
          %v1668 = vsub.f32 %v1051, %v1667
          %v1669 = vand.u32 %v1668, 4294901760
          %1670 = vmatpush.msra.mxu0 %v1669
          %v1671 = vand.u32 %v1049, 4294901760
          %v1672 = vsub.f32 %v1049, %v1671
          %v1673 = vand.u32 %v1672, 4294901760
          %1674 = vmatpush.msra.mxu0 %v1673
          %v1675 = vand.u32 %v1047, 4294901760
          %v1676 = vsub.f32 %v1047, %v1675
          %v1677 = vand.u32 %v1676, 4294901760
          %1678 = vmatpush.msra.mxu0 %v1677
          %v1679 = vand.u32 %v1045, 4294901760
          %v1680 = vsub.f32 %v1045, %v1679
          %v1681 = vand.u32 %v1680, 4294901760
          %1682 = vmatpush.msra.mxu0 %v1681
          %v1683 = vand.u32 %v1043, 4294901760
          %v1684 = vsub.f32 %v1043, %v1683
          %v1685 = vand.u32 %v1684, 4294901760
          %1686 = vmatpush.msra.mxu0 %v1685
          %v1687 = vand.u32 %v1041, 4294901760
          %v1688 = vsub.f32 %v1041, %v1687
          %v1689 = vand.u32 %v1688, 4294901760
          %1690 = vmatpush.msra.mxu0 %v1689
          %v1691 = vand.u32 %v1039, 4294901760
          %v1692 = vsub.f32 %v1039, %v1691
          %v1693 = vand.u32 %v1692, 4294901760
          %1694 = vmatpush.msra.mxu0 %v1693
          %v1695 = vand.u32 %v1037, 4294901760
          %v1696 = vsub.f32 %v1037, %v1695
          %v1697 = vand.u32 %v1696, 4294901760
          %1698 = vmatpush.msra.mxu0 %v1697
          %v1699 = vand.u32 %v1035, 4294901760
          %v1700 = vsub.f32 %v1035, %v1699
          %v1701 = vand.u32 %v1700, 4294901760
          %1702 = vmatpush.msra.mxu0 %v1701
          %v1703 = vand.u32 %v1033, 4294901760
          %v1704 = vsub.f32 %v1033, %v1703
          %v1705 = vand.u32 %v1704, 4294901760
          %1706 = vmatpush.msra.mxu0 %v1705
          %v1707 = vand.u32 %v1031, 4294901760
          %v1708 = vsub.f32 %v1031, %v1707
          %v1709 = vand.u32 %v1708, 4294901760
          %1710 = vmatpush.msra.mxu0 %v1709
          %v1711 = vand.u32 %v1068, 4294901760
          %1712 = vmatmul.f32.gmra.mxu0 %v1711
          %v1713 = vpop.f32.mrf.mxu0
          %v1714 = vadd.f32 %v1645, %v1713
          %1715 = vdwg.mxu0
          %v1716 = vand.u32 %v1061, 4294901760
          %1717 = vmatpush.msra.mxu0 %v1716
          %v1718 = vand.u32 %v1059, 4294901760
          %1719 = vmatpush.msra.mxu0 %v1718
          %v1720 = vand.u32 %v1057, 4294901760
          %1721 = vmatpush.msra.mxu0 %v1720
          %v1722 = vand.u32 %v1055, 4294901760
          %1723 = vmatpush.msra.mxu0 %v1722
          %v1724 = vand.u32 %v1053, 4294901760
          %1725 = vmatpush.msra.mxu0 %v1724
          %v1726 = vand.u32 %v1051, 4294901760
          %1727 = vmatpush.msra.mxu0 %v1726
          %v1728 = vand.u32 %v1049, 4294901760
          %1729 = vmatpush.msra.mxu0 %v1728
          %v1730 = vand.u32 %v1047, 4294901760
          %1731 = vmatpush.msra.mxu0 %v1730
          %v1732 = vand.u32 %v1045, 4294901760
          %1733 = vmatpush.msra.mxu0 %v1732
          %v1734 = vand.u32 %v1043, 4294901760
          %1735 = vmatpush.msra.mxu0 %v1734
          %v1736 = vand.u32 %v1041, 4294901760
          %1737 = vmatpush.msra.mxu0 %v1736
          %v1738 = vand.u32 %v1039, 4294901760
          %1739 = vmatpush.msra.mxu0 %v1738
          %v1740 = vand.u32 %v1037, 4294901760
          %1741 = vmatpush.msra.mxu0 %v1740
          %v1742 = vand.u32 %v1035, 4294901760
          %1743 = vmatpush.msra.mxu0 %v1742
          %v1744 = vand.u32 %v1033, 4294901760
          %1745 = vmatpush.msra.mxu0 %v1744
          %v1746 = vand.u32 %v1031, 4294901760
          %1747 = vmatpush.msra.mxu0 %v1746
          %v1748 = vand.u32 %v1068, 4294901760
          %1749 = vmatmul.f32.gmra.mxu0 %v1748
          %v1750 = vpop.f32.mrf.mxu0
          %v1751 = vadd.f32 %v1714, %v1750
          %1752 = vdwg.mxu0
          %v1753 = vadd.f32 %v1069, %v1410
          %v1754 = vadd.f32 %v1070, %v1751
          %1755 = vst [vmem:[#allocation2] sm:$0xff] %v1753
          %1756 = vst [vmem:[#allocation2 + $0x8] sm:$0xff] %v1754
        $region44: #{tpu_custom_call.1} parent=35 // pred_fallthru
          _
        %p1757 = scmp.eq.s32.totalorder %s40, 5
        // Predicated region
        $region45: #{tpu_custom_call.1} parent=35 // pred_check
          %p1758 = pneg %p1757
        $region46: #{tpu_custom_call.1} parent=35 // pred_check_branch
          %1760 = sbr.rel (%p1758) target = $region48
        $region47: #{tpu_custom_call.1} parent=35 // pred_region
          %v1761 = vld [vmem:[#allocation2] sm:$0xff]
          %v1762 = vld [vmem:[#allocation2 + $0x8] sm:$0xff]
          %1763 = vst [vmem:[%s314] sm:$0xff] %v1761
          %1764 = vst [vmem:[%s314 + $0x8] sm:$0xff] %v1762
        $region48: #{tpu_custom_call.1} parent=35 // pred_fallthru
          _
        %s1765 = sand.u32 %s180, 1
        %s1766 = scalar_lea.sflag [#allocation7], %s1765
        %s1767 = sand.u32 %s180, 1
        %s1768 = smul.addr %s1767, 16
        %s1769 = scalar_lea.vmem [#allocation6], %s1768
        // Predicated region
        $region49: #{tpu_custom_call.1} parent=35 // pred_check
          %p1770 = pneg %p190
        $region50: #{tpu_custom_call.1} parent=35 // pred_check_branch
          %1772 = sbr.rel (%p1770) target = $region52
        $region51: #{tpu_custom_call.1} parent=35 // pred_region
          %s1773 = smul.u32 2, %s39
          %1775 = vsyncadd %s1766, 0
          %s1776 = smul.addr %s38, 8
          %s1777 = sadd.s32 %s1773, %s1776
          %s1778 = smul.addr %s1777, 8
          %s1779 = scalar_lea.hbm %s6, %s1778
          %s1781 = sshll.u32 %s1769, 4
          %s1782 = int_to_ptr.vmem [resolvable:$true] %s1781
          %s1783 = sshll.u32 %s1779, 4
          %s1784 = int_to_ptr.hbm [resolvable:$true] %s1783
          %1786 = dma.vmem_to_hbm [thread:$0]  %s1782, 256, %s1784, %s1766
        $region52: #{tpu_custom_call.1} parent=35 // pred_fallthru
          _
      $region36: #{tpu_custom_call.1} parent=5 // pred_fallthru
        _
      %p1787 = scmp.le.s32.totalorder 2, %s28
      // Predicated region
      $region53: #{tpu_custom_call.1} parent=5 // pred_check
        %p1788 = pneg %p1787
      $region54: #{tpu_custom_call.1} parent=5 // pred_check_branch
        %1790 = sbr.rel (%p1788) target = $region56
      $region55: #{tpu_custom_call.1} parent=5 // pred_region
        %s1791 = ssub.s32 %s28, 2
        // Predicated region
        $region57: #{tpu_custom_call.1} parent=55 // pred_check
          %p1792 = pneg %p196
        $region58: #{tpu_custom_call.1} parent=55 // pred_check_branch
          %1794 = sbr.rel (%p1792) target = $region60
        $region59: #{tpu_custom_call.1} parent=55 // pred_region
          %s1795 = sand.u32 %s181, 1
          %s1796 = scalar_lea.sflag [#allocation7], %s1795
          %s1797 = sand.u32 %s181, 1
          %s1798 = smul.addr %s1797, 16
          %s1799 = scalar_lea.vmem [#allocation6], %s1798
          %1801 = dma.done %s1796, 256
        $region60: #{tpu_custom_call.1} parent=55 // pred_fallthru
          _
      $region56: #{tpu_custom_call.1} parent=5 // pred_fallthru
        _
    $region6: #{tpu_custom_call.1} parent=1 // loop_footer
      %s32 = sadd.s32 1, %s28
    $region7: #{tpu_custom_call.1} parent=1 // loop_footer_branch
      %27 = sbr.rel target = $region3
    $region8: #{tpu_custom_call.1} parent=1 // loop_exit
      _
    %1802 = vsyncpa [#allocation7], 1
    %s1803 = scalar_lea.sflag [#allocation7], 1
    %1804 = vsyncpa %s1803, 1

</llo_original>
